<compile_context>
chip_gen: v7x
topology: tpu7x:2x2x1
jax: 0.10.0
libtpu: 0.0.40
codegen_flags: <defaults>
</compile_context>

<pallas_src>
import functools

import jax
import jax.numpy as jnp
from jax.experimental import pallas as pl
from jax.experimental.pallas import tpu as pltpu


def _round_up(x, m):
    return ((x + m - 1) // m) * m


# ----------------------------------------------------------------------------
# Fused ProGAT kernel: radius aggregation layers + T-round attention pooling,
# one grid step per batch element, everything resident in VMEM.
# ----------------------------------------------------------------------------
def fused_progat_kernel(h_ref, deg_ref, mcol_ref, mrow_ref,
                        wg_ref, bg_ref, wa_ref, ba_ref, out_ref,
                        *, radius, T, D):
    L = h_ref.shape[1]

    h = h_ref[0]            # (L, Ep) f32   node features
    m_col = mcol_ref[0]     # (L, 1)  f32   residue mask (column form)
    m_row = mrow_ref[0]     # (1, L)  f32   residue mask (row form)
    idx = deg_ref[0]        # (L, D)  int32 neighbour indices (-1 = padding)

    # Adjacency built once from the degree list (one-hot accumulation); padded (-1)
    # slots never match a column, masked source nodes are zeroed by m_row.  The per-layer
    # neighbour aggregation then becomes an MXU matmul instead of a gathered masked sum.
    col_ids = jax.lax.broadcasted_iota(jnp.int32, (L, L), 1)
    adj = jnp.zeros((L, L), jnp.float32)
    for d in range(D):                                        # D is small; static unroll
        adj = adj + (idx[:, d:d + 1] == col_ids).astype(jnp.float32)
    adj = adj * m_row
    adj_bf = adj.astype(jnp.bfloat16)                         # 0/1/k counts exact in bf16

    # ---- radius GAT aggregation layers (no HBM round trips between layers) ----
    for r in range(radius):
        w = wg_ref[r]                                         # (Ep, Ep) bf16
        b = bg_ref[r]                                         # (1, Ep)  f32
        agg = jnp.dot(adj_bf, h.astype(jnp.bfloat16),
                      preferred_element_type=jnp.float32)     # (L, Ep)  MXU
        z = jnp.dot((h + agg).astype(jnp.bfloat16), w,
                    preferred_element_type=jnp.float32) + b   # (L, Ep)  MXU
        h = jax.nn.relu(z) * m_col

    # ---- T rounds of masked attention pooling (super-node readout) ----
    wa = wa_ref[...]                                          # (Ep, Ep) bf16
    ba = ba_ref[...]                                          # (1, Ep)  f32

    # loop-invariant over T: hoisted
    hs = jax.nn.relu(jnp.dot(h.astype(jnp.bfloat16), wa,
                             preferred_element_type=jnp.float32) + ba)   # (L, Ep)

    denom = jnp.maximum(jnp.sum(m_row, axis=1, keepdims=True), 1.0)      # (1, 1)
    sup = jnp.dot(m_row, h, preferred_element_type=jnp.float32)          # (1, Ep) MXU
    sup = sup * pl.reciprocal(denom, approx=True)                        # masked mean init

    neg_big = jnp.float32(-1e30)
    for _ in range(T):
        ss = jax.nn.relu(jnp.dot(sup.astype(jnp.bfloat16), wa,
                                 preferred_element_type=jnp.float32) + ba)  # (1, Ep)
        # attention scores over residues: contract Ep of (1,Ep) x (L,Ep) -> (1, L) on MXU
        scores = jax.lax.dot_general(ss, hs, (((1,), (1,)), ((), ())),
                                     preferred_element_type=jnp.float32)
        scores = jnp.where(m_row > 0, scores, neg_big)        # masked softmax
        s_max = jnp.max(scores, axis=1, keepdims=True)
        p = jnp.exp(scores - s_max)
        p_sum = jnp.sum(p, axis=1, keepdims=True)
        p = p * pl.reciprocal(p_sum, approx=True)
        sup = jnp.dot(p, h, preferred_element_type=jnp.float32)          # (1, Ep) MXU

    out_ref[0] = sup


# ----------------------------------------------------------------------------
# pallas_call wrapper (padding / layout plumbing lives here)
# ----------------------------------------------------------------------------
def pro_gat_fused(h0, amino_degree_list, amino_mask, w_gnn, b_gnn, w_att, b_att,
                  *, radius, T):
    B, L, E = h0.shape
    D = amino_degree_list.shape[2]

    # pad feature dim to a lane-dense multiple of 128 and residues to a sublane multiple
    # of 8; zero/-1/0 padding is exact for linear + ReLU + masking + masked softmax.
    Ep = _round_up(max(E, 128), 128)
    Lp = _round_up(L, 8)
    if Ep != E:
        h0 = jnp.pad(h0, ((0, 0), (0, 0), (0, Ep - E)))
        w_gnn = jnp.pad(w_gnn, ((0, 0), (0, Ep - E), (0, Ep - E)))
        b_gnn = jnp.pad(b_gnn, ((0, 0), (0, 0), (0, Ep - E)))
        w_att = jnp.pad(w_att, ((0, Ep - E), (0, Ep - E)))
        b_att = jnp.pad(b_att, ((0, 0), (0, Ep - E)))
    if Lp != L:
        h0 = jnp.pad(h0, ((0, 0), (0, Lp - L), (0, 0)))
        amino_degree_list = jnp.pad(amino_degree_list, ((0, 0), (0, Lp - L), (0, 0)),
                                    constant_values=-1)
        amino_mask = jnp.pad(amino_mask, ((0, 0), (0, Lp - L)))

    h0 = h0.astype(jnp.float32)
    deg = amino_degree_list.astype(jnp.int32)
    mask_col = amino_mask[..., None].astype(jnp.float32)      # (B, Lp, 1)
    mask_row = amino_mask[:, None, :].astype(jnp.float32)     # (B, 1, Lp)
    w_gnn_bf = w_gnn.astype(jnp.bfloat16)                     # MXU fast path
    w_att_bf = w_att.astype(jnp.bfloat16)
    b_gnn = b_gnn.astype(jnp.float32)
    b_att = b_att.astype(jnp.float32)

    kernel = functools.partial(fused_progat_kernel, radius=radius, T=T, D=D)

    out = pl.pallas_call(
        kernel,
        out_shape=jax.ShapeDtypeStruct((B, 1, Ep), jnp.float32),
        grid_spec=pltpu.PrefetchScalarGridSpec(
            num_scalar_prefetch=0,
            grid=(B,),
            in_specs=[
                pl.BlockSpec((1, Lp, Ep), lambda i: (i, 0, 0)),       # h0
                pl.BlockSpec((1, Lp, D), lambda i: (i, 0, 0)),        # degree list
                pl.BlockSpec((1, Lp, 1), lambda i: (i, 0, 0)),        # mask (col)
                pl.BlockSpec((1, 1, Lp), lambda i: (i, 0, 0)),        # mask (row)
                pl.BlockSpec((radius, Ep, Ep), lambda i: (0, 0, 0)),  # stacked GNN weights
                pl.BlockSpec((radius, 1, Ep), lambda i: (0, 0, 0)),   # stacked GNN biases
                pl.BlockSpec((Ep, Ep), lambda i: (0, 0)),             # attention weight
                pl.BlockSpec((1, Ep), lambda i: (0, 0)),              # attention bias
            ],
            out_specs=pl.BlockSpec((1, 1, Ep), lambda i: (i, 0, 0)),
        ),
        # keep batch axis parallel so both TensorCores get work on v7x; default VMEM
        # limits are ample at these tile sizes (raise vmem_limit_bytes for very long L).
        compiler_params=pltpu.CompilerParams(dimension_semantics=("parallel",)),
    )(h0, deg, mask_col, mask_row, w_gnn_bf, b_gnn, w_att_bf, b_att)

    return out[:, 0, :E]


# ----------------------------------------------------------------------------
# Parameter init (deterministic, synthetic) and forward pass
# ----------------------------------------------------------------------------
def init_pro_network_params(key, *, vocab, gat_size, radius):
    ks = jax.random.split(key, 2 * radius + 3)
    scale = 0.1
    return {
        "embed": scale * jax.random.normal(ks[0], (vocab, gat_size), jnp.float32),
        "w_gnn": jnp.stack([scale * jax.random.normal(ks[1 + r], (gat_size, gat_size),
                                                      jnp.float32) for r in range(radius)]),
        "b_gnn": jnp.stack([scale * jax.random.normal(ks[1 + radius + r], (1, gat_size),
                                                      jnp.float32) for r in range(radius)]),
        "w_att": scale * jax.random.normal(ks[-2], (gat_size, gat_size), jnp.float32),
        "b_att": scale * jax.random.normal(ks[-1], (1, gat_size), jnp.float32),
    }


def pro_network_forward(params, tokenized_sent, amino_list, amino_degree_list, amino_mask,
                        *, radius=2, T=1, seq_model_type="only_gat"):
    """ProNetwork.forward for seq_model_type='only_gat' -> seq_gat_feature [B, gat_size]."""
    assert seq_model_type == "only_gat", "only the GAT branch is implemented"
    del tokenized_sent  # unused on the 'only_gat' path

    # embedding lookup stays in XLA: tiny table, gather is already near-optimal there
    h0 = jnp.take(params["embed"], amino_list, axis=0).astype(jnp.float32)   # [B, L, E]

    seq_gat_feature = pro_gat_fused(
        h0, amino_degree_list, amino_mask,
        params["w_gnn"], params["b_gnn"], params["w_att"], params["b_att"],
        radius=radius, T=T)
    # 'only_gat': seq_feature = seq_gat_feature
    return seq_gat_feature


# ----------------------------------------------------------------------------
if __name__ == "__main__":
    B, L, D = 2, 8, 4            # batch, max residues, max degree
    VOCAB = 26                   # amino-acid vocabulary
    GAT_SIZE = 32                # pro/gat embedding size
    RADIUS, T = 2, 1

    key = jax.random.PRNGKey(0)
    k_tok, k_amino, k_deg, k_param = jax.random.split(key, 4)

    tokenized_sent = jax.random.randint(k_tok, (B, L), 0, 30, dtype=jnp.int32)
    amino_list = jax.random.randint(k_amino, (B, L), 0, VOCAB, dtype=jnp.int32)
    amino_degree_list = jax.random.randint(k_deg, (B, L, D), 0, L, dtype=jnp.int32)
    # pad last neighbour slot (invalid) and last two residues (masked out)
    amino_degree_list = amino_degree_list.at[:, :, -1].set(-1)
    amino_mask = jnp.concatenate(
        [jnp.ones((B, L - 2), jnp.float32), jnp.zeros((B, 2), jnp.float32)], axis=1)

    params = init_pro_network_params(k_param, vocab=VOCAB, gat_size=GAT_SIZE, radius=RADIUS)

    out = pro_network_forward(params, tokenized_sent, amino_list, amino_degree_list,
                              amino_mask, radius=RADIUS, T=T, seq_model_type="only_gat")
    out = jax.block_until_ready(out)
    assert out.shape == (B, GAT_SIZE), out.shape
    assert bool(jnp.all(jnp.isfinite(out)))
    print("KERNEL_OK")
</pallas_src>

<mosaic_0001>
module attributes {stable_mosaic.version = 11 : i64} {
  func.func @fused_progat_kernel(%arg0: i32, %arg1: memref<1x8x128xf32, #tpu.memory_space<vmem>>, %arg2: memref<1x8x4xi32, #tpu.memory_space<vmem>>, %arg3: memref<1x8x1xf32, #tpu.memory_space<vmem>>, %arg4: memref<1x1x8xf32, #tpu.memory_space<vmem>>, %arg5: memref<2x128x128xbf16, #tpu.memory_space<vmem>>, %arg6: memref<2x1x128xf32, #tpu.memory_space<vmem>>, %arg7: memref<128x128xbf16, #tpu.memory_space<vmem>>, %arg8: memref<1x128xf32, #tpu.memory_space<vmem>>, %arg9: memref<1x1x128xf32, #tpu.memory_space<vmem>>) attributes {dimension_semantics = [#tpu.dimension_semantics<parallel>], iteration_bounds = array<i64: 2>, scalar_prefetch = 0 : i64, scratch_operands = 0 : i64, tpu.core_type = #tpu.core_type<tc>, window_params = [{transform_indices = @transform_0, window_bounds = array<i64: 1, 8, 128>}, {transform_indices = @transform_1, window_bounds = array<i64: 1, 8, 4>}, {transform_indices = @transform_2, window_bounds = array<i64: 1, 8, 1>}, {transform_indices = @transform_3, window_bounds = array<i64: 1, 1, 8>}, {pipeline_mode = #tpu.pipeline_mode<synchronous>, transform_indices = @transform_4, window_bounds = array<i64: 2, 128, 128>}, {pipeline_mode = #tpu.pipeline_mode<synchronous>, transform_indices = @transform_5, window_bounds = array<i64: 2, 1, 128>}, {pipeline_mode = #tpu.pipeline_mode<synchronous>, transform_indices = @transform_6, window_bounds = array<i64: 128, 128>}, {pipeline_mode = #tpu.pipeline_mode<synchronous>, transform_indices = @transform_7, window_bounds = array<i64: 1, 128>}, {transform_indices = @transform_8, window_bounds = array<i64: 1, 1, 128>}]} {
    %c0 = arith.constant 0 : index
    %c0_0 = arith.constant 0 : index
    %c0_1 = arith.constant 0 : index
    %0 = vector.load %arg1[%c0, %c0_0, %c0_1] : memref<1x8x128xf32, #tpu.memory_space<vmem>>, vector<1x8x128xf32>
    %1 = vector.shape_cast %0 : vector<1x8x128xf32> to vector<8x128xf32>
    %c0_2 = arith.constant 0 : index
    %c0_3 = arith.constant 0 : index
    %c0_4 = arith.constant 0 : index
    %2 = vector.load %arg3[%c0_2, %c0_3, %c0_4] : memref<1x8x1xf32, #tpu.memory_space<vmem>>, vector<1x8x1xf32>
    %3 = vector.shape_cast %2 : vector<1x8x1xf32> to vector<8x1xf32>
    %c0_5 = arith.constant 0 : index
    %c0_6 = arith.constant 0 : index
    %c0_7 = arith.constant 0 : index
    %4 = vector.load %arg4[%c0_5, %c0_6, %c0_7] : memref<1x1x8xf32, #tpu.memory_space<vmem>>, vector<1x1x8xf32>
    %5 = vector.shape_cast %4 : vector<1x1x8xf32> to vector<1x8xf32>
    %c0_8 = arith.constant 0 : index
    %c0_9 = arith.constant 0 : index
    %c0_10 = arith.constant 0 : index
    %6 = vector.load %arg2[%c0_8, %c0_9, %c0_10] : memref<1x8x4xi32, #tpu.memory_space<vmem>>, vector<1x8x4xi32>
    %7 = vector.shape_cast %6 : vector<1x8x4xi32> to vector<8x4xi32>
    %8 = tpu.iota {dimensions = array<i32: 1>} : vector<8x8xi32>
    %cst = arith.constant 0.000000e+00 : f32
    %9 = vector.broadcast %cst : f32 to vector<8x8xf32>
    %10 = vector.extract_strided_slice %7 {offsets = [0, 0], sizes = [8, 1], strides = [1, 1]} : vector<8x4xi32> to vector<8x1xi32>
    %11 = vector.broadcast %10 : vector<8x1xi32> to vector<8x8xi32>
    %12 = arith.cmpi eq, %11, %8 : vector<8x8xi32>
    %13 = arith.extui %12 : vector<8x8xi1> to vector<8x8xi32>
    %14 = arith.sitofp %13 : vector<8x8xi32> to vector<8x8xf32>
    %15 = arith.addf %9, %14 : vector<8x8xf32>
    %16 = vector.extract_strided_slice %7 {offsets = [0, 1], sizes = [8, 1], strides = [1, 1]} : vector<8x4xi32> to vector<8x1xi32>
    %17 = vector.broadcast %16 : vector<8x1xi32> to vector<8x8xi32>
    %18 = arith.cmpi eq, %17, %8 : vector<8x8xi32>
    %19 = arith.extui %18 : vector<8x8xi1> to vector<8x8xi32>
    %20 = arith.sitofp %19 : vector<8x8xi32> to vector<8x8xf32>
    %21 = arith.addf %15, %20 : vector<8x8xf32>
    %22 = vector.extract_strided_slice %7 {offsets = [0, 2], sizes = [8, 1], strides = [1, 1]} : vector<8x4xi32> to vector<8x1xi32>
    %23 = vector.broadcast %22 : vector<8x1xi32> to vector<8x8xi32>
    %24 = arith.cmpi eq, %23, %8 : vector<8x8xi32>
    %25 = arith.extui %24 : vector<8x8xi1> to vector<8x8xi32>
    %26 = arith.sitofp %25 : vector<8x8xi32> to vector<8x8xf32>
    %27 = arith.addf %21, %26 : vector<8x8xf32>
    %28 = vector.extract_strided_slice %7 {offsets = [0, 3], sizes = [8, 1], strides = [1, 1]} : vector<8x4xi32> to vector<8x1xi32>
    %29 = vector.broadcast %28 : vector<8x1xi32> to vector<8x8xi32>
    %30 = arith.cmpi eq, %29, %8 : vector<8x8xi32>
    %31 = arith.extui %30 : vector<8x8xi1> to vector<8x8xi32>
    %32 = arith.sitofp %31 : vector<8x8xi32> to vector<8x8xf32>
    %33 = arith.addf %27, %32 : vector<8x8xf32>
    %34 = vector.broadcast %5 : vector<1x8xf32> to vector<8x8xf32>
    %35 = arith.mulf %33, %34 : vector<8x8xf32>
    %36 = arith.truncf %35 : vector<8x8xf32> to vector<8x8xbf16>
    %c0_11 = arith.constant 0 : index
    %c0_12 = arith.constant 0 : index
    %c0_13 = arith.constant 0 : index
    %37 = vector.load %arg5[%c0_11, %c0_12, %c0_13] : memref<2x128x128xbf16, #tpu.memory_space<vmem>>, vector<1x128x128xbf16>
    %38 = vector.shape_cast %37 : vector<1x128x128xbf16> to vector<128x128xbf16>
    %c0_14 = arith.constant 0 : index
    %c0_15 = arith.constant 0 : index
    %c0_16 = arith.constant 0 : index
    %39 = vector.load %arg6[%c0_14, %c0_15, %c0_16] : memref<2x1x128xf32, #tpu.memory_space<vmem>>, vector<1x1x128xf32>
    %40 = vector.shape_cast %39 : vector<1x1x128xf32> to vector<1x128xf32>
    %41 = arith.truncf %1 : vector<8x128xf32> to vector<8x128xbf16>
    %cst_17 = arith.constant dense<0.000000e+00> : vector<8x128xf32>
    %42 = tpu.matmul %36, %41, %cst_17 {dimension_numbers = #tpu.dot_dimension_numbers<[1], [0], [0], [1], [0, 0, 1, 1], [], []>} : vector<8x8xbf16>, vector<8x128xbf16>, vector<8x128xf32> -> vector<8x128xf32>
    %43 = arith.addf %1, %42 : vector<8x128xf32>
    %44 = arith.truncf %43 : vector<8x128xf32> to vector<8x128xbf16>
    %cst_18 = arith.constant dense<0.000000e+00> : vector<8x128xf32>
    %45 = tpu.matmul %44, %38, %cst_18 {dimension_numbers = #tpu.dot_dimension_numbers<[1], [0], [0], [1], [0, 0, 1, 1], [], []>} : vector<8x128xbf16>, vector<128x128xbf16>, vector<8x128xf32> -> vector<8x128xf32>
    %46 = vector.broadcast %40 : vector<1x128xf32> to vector<8x128xf32>
    %47 = arith.addf %45, %46 : vector<8x128xf32>
    %cst_19 = arith.constant 0.000000e+00 : f32
    %48 = vector.broadcast %cst_19 : f32 to vector<8x128xf32>
    %49 = arith.maximumf %47, %48 : vector<8x128xf32>
    %50 = vector.broadcast %3 : vector<8x1xf32> to vector<8x128xf32>
    %51 = arith.mulf %49, %50 : vector<8x128xf32>
    %c1 = arith.constant 1 : index
    %c0_20 = arith.constant 0 : index
    %c0_21 = arith.constant 0 : index
    %52 = vector.load %arg5[%c1, %c0_20, %c0_21] : memref<2x128x128xbf16, #tpu.memory_space<vmem>>, vector<1x128x128xbf16>
    %53 = vector.shape_cast %52 : vector<1x128x128xbf16> to vector<128x128xbf16>
    %c1_22 = arith.constant 1 : index
    %c0_23 = arith.constant 0 : index
    %c0_24 = arith.constant 0 : index
    %54 = vector.load %arg6[%c1_22, %c0_23, %c0_24] : memref<2x1x128xf32, #tpu.memory_space<vmem>>, vector<1x1x128xf32>
    %55 = vector.shape_cast %54 : vector<1x1x128xf32> to vector<1x128xf32>
    %56 = arith.truncf %51 : vector<8x128xf32> to vector<8x128xbf16>
    %cst_25 = arith.constant dense<0.000000e+00> : vector<8x128xf32>
    %57 = tpu.matmul %36, %56, %cst_25 {dimension_numbers = #tpu.dot_dimension_numbers<[1], [0], [0], [1], [0, 0, 1, 1], [], []>} : vector<8x8xbf16>, vector<8x128xbf16>, vector<8x128xf32> -> vector<8x128xf32>
    %58 = arith.addf %51, %57 : vector<8x128xf32>
    %59 = arith.truncf %58 : vector<8x128xf32> to vector<8x128xbf16>
    %cst_26 = arith.constant dense<0.000000e+00> : vector<8x128xf32>
    %60 = tpu.matmul %59, %53, %cst_26 {dimension_numbers = #tpu.dot_dimension_numbers<[1], [0], [0], [1], [0, 0, 1, 1], [], []>} : vector<8x128xbf16>, vector<128x128xbf16>, vector<8x128xf32> -> vector<8x128xf32>
    %61 = vector.broadcast %55 : vector<1x128xf32> to vector<8x128xf32>
    %62 = arith.addf %60, %61 : vector<8x128xf32>
    %cst_27 = arith.constant 0.000000e+00 : f32
    %63 = vector.broadcast %cst_27 : f32 to vector<8x128xf32>
    %64 = arith.maximumf %62, %63 : vector<8x128xf32>
    %65 = vector.broadcast %3 : vector<8x1xf32> to vector<8x128xf32>
    %66 = arith.mulf %64, %65 : vector<8x128xf32>
    %c0_28 = arith.constant 0 : index
    %c0_29 = arith.constant 0 : index
    %67 = vector.load %arg7[%c0_28, %c0_29] : memref<128x128xbf16, #tpu.memory_space<vmem>>, vector<128x128xbf16>
    %c0_30 = arith.constant 0 : index
    %c0_31 = arith.constant 0 : index
    %68 = vector.load %arg8[%c0_30, %c0_31] : memref<1x128xf32, #tpu.memory_space<vmem>>, vector<1x128xf32>
    %69 = arith.truncf %66 : vector<8x128xf32> to vector<8x128xbf16>
    %cst_32 = arith.constant dense<0.000000e+00> : vector<8x128xf32>
    %70 = tpu.matmul %69, %67, %cst_32 {dimension_numbers = #tpu.dot_dimension_numbers<[1], [0], [0], [1], [0, 0, 1, 1], [], []>} : vector<8x128xbf16>, vector<128x128xbf16>, vector<8x128xf32> -> vector<8x128xf32>
    %71 = vector.broadcast %68 : vector<1x128xf32> to vector<8x128xf32>
    %72 = arith.addf %70, %71 : vector<8x128xf32>
    %cst_33 = arith.constant 0.000000e+00 : f32
    %73 = vector.broadcast %cst_33 : f32 to vector<8x128xf32>
    %74 = arith.maximumf %72, %73 : vector<8x128xf32>
    %cst_34 = arith.constant dense<0.000000e+00> : vector<1xf32>
    %75 = vector.multi_reduction <add>, %5, %cst_34 [1] : vector<1x8xf32> to vector<1xf32>
    %76 = vector.shape_cast %75 : vector<1xf32> to vector<1x1xf32>
    %cst_35 = arith.constant 1.000000e+00 : f32
    %77 = vector.broadcast %cst_35 : f32 to vector<1x1xf32>
    %78 = arith.maximumf %76, %77 : vector<1x1xf32>
    %cst_36 = arith.constant dense<0.000000e+00> : vector<1x128xf32>
    %79 = tpu.matmul %5, %66, %cst_36 {dimension_numbers = #tpu.dot_dimension_numbers<[1], [0], [0], [1], [0, 0, 1, 1], [], []>} : vector<1x8xf32>, vector<8x128xf32>, vector<1x128xf32> -> vector<1x128xf32>
    %80 = tpu.reciprocal %78 {approx = true} : vector<1x1xf32> -> vector<1x1xf32>
    %81 = vector.broadcast %80 : vector<1x1xf32> to vector<1x128xf32>
    %82 = arith.mulf %79, %81 : vector<1x128xf32>
    %83 = arith.truncf %82 : vector<1x128xf32> to vector<1x128xbf16>
    %cst_37 = arith.constant dense<0.000000e+00> : vector<1x128xf32>
    %84 = tpu.matmul %83, %67, %cst_37 {dimension_numbers = #tpu.dot_dimension_numbers<[1], [0], [0], [1], [0, 0, 1, 1], [], []>} : vector<1x128xbf16>, vector<128x128xbf16>, vector<1x128xf32> -> vector<1x128xf32>
    %85 = arith.addf %84, %68 : vector<1x128xf32>
    %cst_38 = arith.constant 0.000000e+00 : f32
    %86 = vector.broadcast %cst_38 : f32 to vector<1x128xf32>
    %87 = arith.maximumf %85, %86 : vector<1x128xf32>
    %cst_39 = arith.constant dense<0.000000e+00> : vector<1x8xf32>
    %88 = tpu.matmul %87, %74, %cst_39 {dimension_numbers = #tpu.dot_dimension_numbers<[1], [1], [0], [0], [0, 0, 1, 0], [], []>} : vector<1x128xf32>, vector<8x128xf32>, vector<1x8xf32> -> vector<1x8xf32>
    %cst_40 = arith.constant 0.000000e+00 : f32
    %89 = vector.broadcast %cst_40 : f32 to vector<1x8xf32>
    %90 = arith.cmpf ogt, %5, %89 : vector<1x8xf32>
    %cst_41 = arith.constant -1.000000e+30 : f32
    %91 = vector.broadcast %cst_41 : f32 to vector<1x8xf32>
    %92 = arith.select %90, %88, %91 : vector<1x8xi1>, vector<1x8xf32>
    %cst_42 = arith.constant dense<0xFF800000> : vector<1xf32>
    %93 = vector.multi_reduction <maximumf>, %92, %cst_42 [1] : vector<1x8xf32> to vector<1xf32>
    %94 = vector.shape_cast %93 : vector<1xf32> to vector<1x1xf32>
    %95 = vector.broadcast %94 : vector<1x1xf32> to vector<1x8xf32>
    %96 = arith.subf %92, %95 : vector<1x8xf32>
    %97 = math.exp %96 : vector<1x8xf32>
    %cst_43 = arith.constant dense<0.000000e+00> : vector<1xf32>
    %98 = vector.multi_reduction <add>, %97, %cst_43 [1] : vector<1x8xf32> to vector<1xf32>
    %99 = vector.shape_cast %98 : vector<1xf32> to vector<1x1xf32>
    %100 = tpu.reciprocal %99 {approx = true} : vector<1x1xf32> -> vector<1x1xf32>
    %101 = vector.broadcast %100 : vector<1x1xf32> to vector<1x8xf32>
    %102 = arith.mulf %97, %101 : vector<1x8xf32>
    %cst_44 = arith.constant dense<0.000000e+00> : vector<1x128xf32>
    %103 = tpu.matmul %102, %66, %cst_44 {dimension_numbers = #tpu.dot_dimension_numbers<[1], [0], [0], [1], [0, 0, 1, 1], [], []>} : vector<1x8xf32>, vector<8x128xf32>, vector<1x128xf32> -> vector<1x128xf32>
    %c0_45 = arith.constant 0 : index
    %c0_46 = arith.constant 0 : index
    %c0_47 = arith.constant 0 : index
    %104 = vector.load %arg9[%c0_45, %c0_46, %c0_47] : memref<1x1x128xf32, #tpu.memory_space<vmem>>, vector<1x1x128xf32>
    %105 = vector.shape_cast %104 : vector<1x1x128xf32> to vector<1x128xf32>
    %106 = vector.shape_cast %103 : vector<1x128xf32> to vector<1x1x128xf32>
    tpu.vector_store %arg9[%c0_45, %c0_46, %c0_47], %106 {strides = array<i32>} : memref<1x1x128xf32, #tpu.memory_space<vmem>>, vector<1x1x128xf32>,
    return
  }
  func.func @transform_0(%arg0: i32) -> (i32, i32, i32) {
    %c0_i32 = arith.constant 0 : i32
    %c0_i32_0 = arith.constant 0 : i32
    %c0_i32_1 = arith.constant 0 : i32
    return %arg0, %c0_i32, %c0_i32_0 : i32, i32, i32
  }
  func.func @transform_1(%arg0: i32) -> (i32, i32, i32) {
    %c0_i32 = arith.constant 0 : i32
    %c0_i32_0 = arith.constant 0 : i32
    %c0_i32_1 = arith.constant 0 : i32
    return %arg0, %c0_i32, %c0_i32_0 : i32, i32, i32
  }
  func.func @transform_2(%arg0: i32) -> (i32, i32, i32) {
    %c0_i32 = arith.constant 0 : i32
    %c0_i32_0 = arith.constant 0 : i32
    %c0_i32_1 = arith.constant 0 : i32
    return %arg0, %c0_i32, %c0_i32_0 : i32, i32, i32
  }
  func.func @transform_3(%arg0: i32) -> (i32, i32, i32) {
    %c0_i32 = arith.constant 0 : i32
    %c0_i32_0 = arith.constant 0 : i32
    %c0_i32_1 = arith.constant 0 : i32
    return %arg0, %c0_i32, %c0_i32_0 : i32, i32, i32
  }
  func.func @transform_4(%arg0: i32) -> (i32, i32, i32) {
    %c0_i32 = arith.constant 0 : i32
    %c0_i32_0 = arith.constant 0 : i32
    %c0_i32_1 = arith.constant 0 : i32
    %c0_i32_2 = arith.constant 0 : i32
    return %c0_i32, %c0_i32_0, %c0_i32_1 : i32, i32, i32
  }
  func.func @transform_5(%arg0: i32) -> (i32, i32, i32) {
    %c0_i32 = arith.constant 0 : i32
    %c0_i32_0 = arith.constant 0 : i32
    %c0_i32_1 = arith.constant 0 : i32
    %c0_i32_2 = arith.constant 0 : i32
    return %c0_i32, %c0_i32_0, %c0_i32_1 : i32, i32, i32
  }
  func.func @transform_6(%arg0: i32) -> (i32, i32) {
    %c0_i32 = arith.constant 0 : i32
    %c0_i32_0 = arith.constant 0 : i32
    %c0_i32_1 = arith.constant 0 : i32
    return %c0_i32, %c0_i32_0 : i32, i32
  }
  func.func @transform_7(%arg0: i32) -> (i32, i32) {
    %c0_i32 = arith.constant 0 : i32
    %c0_i32_0 = arith.constant 0 : i32
    %c0_i32_1 = arith.constant 0 : i32
    return %c0_i32, %c0_i32_0 : i32, i32
  }
  func.func @transform_8(%arg0: i32) -> (i32, i32, i32) {
    %c0_i32 = arith.constant 0 : i32
    %c0_i32_0 = arith.constant 0 : i32
    %c0_i32_1 = arith.constant 0 : i32
    return %arg0, %c0_i32, %c0_i32_0 : i32, i32, i32
  }
}

</mosaic_0001>

<llo_original>
// kernel: tpu_custom_call.1
$region0: #{tpu_custom_call.1}
  #allocation0 [shape = 'u32[]', space=smem, size = 0x4, offset = 0x4, fixed_abs, tag = 'smem constant byte address 0x4 - core index']
  #allocation1 [shape = 'u32[144,128]{1,0:T(1,128)}', space=vmem, size = 0x12000, scoped, tag = 'internal scratch']
  %s0 = inlined_call_operand.hbm [shape: f32[2,8,128], index: 0, kind: input, shape index: {}]
  %s1 = inlined_call_operand.vmem [shape: s32[2,8,4], index: 1, kind: input, shape index: {}]
  %s2 = inlined_call_operand.vmem [shape: f32[2,8,1], index: 2, kind: input, shape index: {}]
  %s3 = inlined_call_operand.hbm [shape: f32[2,1,8], index: 3, kind: input, shape index: {}]
  %s4 = inlined_call_operand.hbm [shape: bf16[2,128,128], index: 4, kind: input, shape index: {}]
  %s5 = inlined_call_operand.hbm [shape: f32[2,1,128], index: 5, kind: input, shape index: {}]
  %s6 = inlined_call_operand.vmem [shape: bf16[128,128], index: 6, kind: input, shape index: {}]
  %s7 = inlined_call_operand.vmem [shape: f32[1,128], index: 7, kind: input, shape index: {}]
  %s8 = inlined_call_operand.hbm [shape: f32[2,1,128], index: 8, kind: output, shape index: {}]
  %s9 = sld [smem:[#allocation0]]
  $region81: #{tpu_custom_call.1} parent=0
    _
  %s11 = ssub.s32 1, %s9
  %s12 = scalar_select 0, %s11, %s9
  $region1: #{tpu_custom_call.1} parent=0
    #allocation2 [shape = 'u8[8192]{0}', space=vmem, size = 0x2000, scoped, tag = 'input window, operand 0']
    #allocation3 [shape = 's32[2]{0}', space=sflag, size = 0x8, scoped, tag = 'scoped memory for tpu_custom_call.1']
    #allocation4 [shape = 's32[2]{0}', space=sflag, size = 0x8, scoped, tag = 'scoped memory for tpu_custom_call.1']
    #allocation5 [shape = 'u8[1024]{0}', space=vmem, size = 0x400, scoped, tag = 'input window, operand 3']
    #allocation6 [shape = 's32[2]{0}', space=sflag, size = 0x8, scoped, tag = 'scoped memory for tpu_custom_call.1']
    #allocation7 [shape = 'u8[65536]{0}', space=vmem, size = 0x10000, scoped, tag = 'input window, operand 4, single buffered']
    #allocation8 [shape = 'u8[1024]{0}', space=vmem, size = 0x400, scoped, tag = 'input window, operand 5, single buffered']
    #allocation9 [shape = 's32[1]{0}', space=sflag, size = 0x4, scoped, tag = 'scoped memory for tpu_custom_call.1']
    #allocation10 [shape = 'u8[1024]{0}', space=vmem, size = 0x400, scoped, tag = 'output window, operand 0']
    %13 = vsyncpa [#allocation3], 0
    %s14 = scalar_lea.sflag [#allocation3], 1
    %15 = vsyncpa %s14, 0
    %16 = vsyncpa [#allocation6], 0
    %s17 = scalar_lea.sflag [#allocation6], 1
    %18 = vsyncpa %s17, 0
    %19 = vsyncpa [#allocation9], 0
    %20 = vsyncpa [#allocation4], 0
    %s21 = scalar_lea.sflag [#allocation4], 1
    %22 = vsyncpa %s21, 0
    loop: start=0, step=1, limit=4
    $region2: #{tpu_custom_call.1} parent=1 // loop_pre_header
      _
    $region3: #{tpu_custom_call.1} parent=1 // loop_header
      %s24 = sphi 0, %s28
      %p25 = scmp.ge.s32.totalorder %s24, 4
      %s34 = sphi 0, %s36
      %s37 = sphi 0, %s34
      %s38 = sphi 0, %s37
      %s54 = sphi 0, %s38
      %s60 = sphi 0, %s62
      %s63 = sphi 0, %s60
      %s64 = sphi 0, %s63
      %s80 = sphi 0, %s64
      %s86 = sphi 0, %s88
      %s89 = sphi 0, %s86
      %s90 = sphi 0, %s89
      %s106 = sphi 0, %s90
      %s112 = sphi 0, %s114
      %s115 = sphi 0, %s112
      %s116 = sphi 0, %s115
      %s132 = sphi 0, %s116
      %s136 = sphi 0, %s136
      %s138 = sphi 0, %s136
      %s139 = sphi 0, %s138
      %s153 = sphi 0, %s139
      %s157 = sphi 0, %s157
      %s159 = sphi 0, %s157
      %s160 = sphi 0, %s159
      %s174 = sphi 0, %s160
      %s178 = sphi 0, %s178
      %s180 = sphi 0, %s178
      %s181 = sphi 0, %s180
      %s195 = sphi 0, %s181
      %s199 = sphi 0, %s199
      %s201 = sphi 0, %s199
      %s202 = sphi 0, %s201
      %s216 = sphi 0, %s202
      %s222 = sphi 0, %s224
      %s225 = sphi 0, %s222
      %s226 = sphi 0, %s225
      %s242 = sphi 0, %s226
    $region4: #{tpu_custom_call.1} parent=1 // loop_header_branch
      %27 = sbr.rel (%p25) target = $region8
    $region5: #{tpu_custom_call.1} parent=1 // loop_body
      %s29 = ssub.s32 %s24, 1
      %s30 = ssub.s32 %s24, 2
      %s31 = sadd.s32 %s24, 1
      %s32 = ssub.s32 %s24, %s31
      %p33 = scmp.eq.s32.totalorder %s32, 0
      %s35 = sadd.s32 %s34, 1
      %s36 = scalar_select %p33, %s34, %s35
      %p39 = pneg %p33
      %p40 = scmp.eq.s32.totalorder %s24, 1
      %p41 = por %p39, %p40
      %p42 = scmp.ne.s32.totalorder %s34, %s37
      %p43 = scmp.eq.s32.totalorder %s24, 0
      %p44 = por %p42, %p43
      %p45 = scmp.ne.s32.totalorder %s34, %s37
      %p46 = scmp.eq.s32.totalorder %s29, 1
      %p47 = por %p45, %p46
      %p48 = scmp.ne.s32.totalorder %s37, %s38
      %p49 = scmp.eq.s32.totalorder %s29, 0
      %p50 = por %p48, %p49
      %p51 = scmp.ne.s32.totalorder %s37, %s38
      %p52 = scmp.eq.s32.totalorder %s30, 1
      %p53 = por %p51, %p52
      %p55 = scmp.ne.s32.totalorder %s38, %s54
      %p56 = scmp.eq.s32.totalorder %s30, 0
      %p57 = por %p55, %p56
      %s58 = ssub.s32 %s24, %s31
      %p59 = scmp.eq.s32.totalorder %s58, 0
      %s61 = sadd.s32 %s60, 1
      %s62 = scalar_select %p59, %s60, %s61
      %p65 = pneg %p59
      %p66 = scmp.eq.s32.totalorder %s24, 1
      %p67 = por %p65, %p66
      %p68 = scmp.ne.s32.totalorder %s60, %s63
      %p69 = scmp.eq.s32.totalorder %s24, 0
      %p70 = por %p68, %p69
      %p71 = scmp.ne.s32.totalorder %s60, %s63
      %p72 = scmp.eq.s32.totalorder %s29, 1
      %p73 = por %p71, %p72
      %p74 = scmp.ne.s32.totalorder %s63, %s64
      %p75 = scmp.eq.s32.totalorder %s29, 0
      %p76 = por %p74, %p75
      %p77 = scmp.ne.s32.totalorder %s63, %s64
      %p78 = scmp.eq.s32.totalorder %s30, 1
      %p79 = por %p77, %p78
      %p81 = scmp.ne.s32.totalorder %s64, %s80
      %p82 = scmp.eq.s32.totalorder %s30, 0
      %p83 = por %p81, %p82
      %s84 = ssub.s32 %s24, %s31
      %p85 = scmp.eq.s32.totalorder %s84, 0
      %s87 = sadd.s32 %s86, 1
      %s88 = scalar_select %p85, %s86, %s87
      %p91 = pneg %p85
      %p92 = scmp.eq.s32.totalorder %s24, 1
      %p93 = por %p91, %p92
      %p94 = scmp.ne.s32.totalorder %s86, %s89
      %p95 = scmp.eq.s32.totalorder %s24, 0
      %p96 = por %p94, %p95
      %p97 = scmp.ne.s32.totalorder %s86, %s89
      %p98 = scmp.eq.s32.totalorder %s29, 1
      %p99 = por %p97, %p98
      %p100 = scmp.ne.s32.totalorder %s89, %s90
      %p101 = scmp.eq.s32.totalorder %s29, 0
      %p102 = por %p100, %p101
      %p103 = scmp.ne.s32.totalorder %s89, %s90
      %p104 = scmp.eq.s32.totalorder %s30, 1
      %p105 = por %p103, %p104
      %p107 = scmp.ne.s32.totalorder %s90, %s106
      %p108 = scmp.eq.s32.totalorder %s30, 0
      %p109 = por %p107, %p108
      %s110 = ssub.s32 %s24, %s31
      %p111 = scmp.eq.s32.totalorder %s110, 0
      %s113 = sadd.s32 %s112, 1
      %s114 = scalar_select %p111, %s112, %s113
      %p117 = pneg %p111
      %p118 = scmp.eq.s32.totalorder %s24, 1
      %p119 = por %p117, %p118
      %p120 = scmp.ne.s32.totalorder %s112, %s115
      %p121 = scmp.eq.s32.totalorder %s24, 0
      %p122 = por %p120, %p121
      %p123 = scmp.ne.s32.totalorder %s112, %s115
      %p124 = scmp.eq.s32.totalorder %s29, 1
      %p125 = por %p123, %p124
      %p126 = scmp.ne.s32.totalorder %s115, %s116
      %p127 = scmp.eq.s32.totalorder %s29, 0
      %p128 = por %p126, %p127
      %p129 = scmp.ne.s32.totalorder %s115, %s116
      %p130 = scmp.eq.s32.totalorder %s30, 1
      %p131 = por %p129, %p130
      %p133 = scmp.ne.s32.totalorder %s116, %s132
      %p134 = scmp.eq.s32.totalorder %s30, 0
      %p135 = por %p133, %p134
      %s137 = sadd.s32 %s136, 1
      %p140 = scmp.eq.s32.totalorder %s24, 1
      %p141 = scmp.ne.s32.totalorder %s136, %s138
      %p142 = scmp.eq.s32.totalorder %s24, 0
      %p143 = por %p141, %p142
      %p144 = scmp.ne.s32.totalorder %s136, %s138
      %p145 = scmp.eq.s32.totalorder %s29, 1
      %p146 = por %p144, %p145
      %p147 = scmp.ne.s32.totalorder %s138, %s139
      %p148 = scmp.eq.s32.totalorder %s29, 0
      %p149 = por %p147, %p148
      %p150 = scmp.ne.s32.totalorder %s138, %s139
      %p151 = scmp.eq.s32.totalorder %s30, 1
      %p152 = por %p150, %p151
      %p154 = scmp.ne.s32.totalorder %s139, %s153
      %p155 = scmp.eq.s32.totalorder %s30, 0
      %p156 = por %p154, %p155
      %s158 = sadd.s32 %s157, 1
      %p161 = scmp.eq.s32.totalorder %s24, 1
      %p162 = scmp.ne.s32.totalorder %s157, %s159
      %p163 = scmp.eq.s32.totalorder %s24, 0
      %p164 = por %p162, %p163
      %p165 = scmp.ne.s32.totalorder %s157, %s159
      %p166 = scmp.eq.s32.totalorder %s29, 1
      %p167 = por %p165, %p166
      %p168 = scmp.ne.s32.totalorder %s159, %s160
      %p169 = scmp.eq.s32.totalorder %s29, 0
      %p170 = por %p168, %p169
      %p171 = scmp.ne.s32.totalorder %s159, %s160
      %p172 = scmp.eq.s32.totalorder %s30, 1
      %p173 = por %p171, %p172
      %p175 = scmp.ne.s32.totalorder %s160, %s174
      %p176 = scmp.eq.s32.totalorder %s30, 0
      %p177 = por %p175, %p176
      %s179 = sadd.s32 %s178, 1
      %p182 = scmp.eq.s32.totalorder %s24, 1
      %p183 = scmp.ne.s32.totalorder %s178, %s180
      %p184 = scmp.eq.s32.totalorder %s24, 0
      %p185 = por %p183, %p184
      %p186 = scmp.ne.s32.totalorder %s178, %s180
      %p187 = scmp.eq.s32.totalorder %s29, 1
      %p188 = por %p186, %p187
      %p189 = scmp.ne.s32.totalorder %s180, %s181
      %p190 = scmp.eq.s32.totalorder %s29, 0
      %p191 = por %p189, %p190
      %p192 = scmp.ne.s32.totalorder %s180, %s181
      %p193 = scmp.eq.s32.totalorder %s30, 1
      %p194 = por %p192, %p193
      %p196 = scmp.ne.s32.totalorder %s181, %s195
      %p197 = scmp.eq.s32.totalorder %s30, 0
      %p198 = por %p196, %p197
      %s200 = sadd.s32 %s199, 1
      %p203 = scmp.eq.s32.totalorder %s24, 1
      %p204 = scmp.ne.s32.totalorder %s199, %s201
      %p205 = scmp.eq.s32.totalorder %s24, 0
      %p206 = por %p204, %p205
      %p207 = scmp.ne.s32.totalorder %s199, %s201
      %p208 = scmp.eq.s32.totalorder %s29, 1
      %p209 = por %p207, %p208
      %p210 = scmp.ne.s32.totalorder %s201, %s202
      %p211 = scmp.eq.s32.totalorder %s29, 0
      %p212 = por %p210, %p211
      %p213 = scmp.ne.s32.totalorder %s201, %s202
      %p214 = scmp.eq.s32.totalorder %s30, 1
      %p215 = por %p213, %p214
      %p217 = scmp.ne.s32.totalorder %s202, %s216
      %p218 = scmp.eq.s32.totalorder %s30, 0
      %p219 = por %p217, %p218
      %s220 = ssub.s32 %s24, %s31
      %p221 = scmp.eq.s32.totalorder %s220, 0
      %s223 = sadd.s32 %s222, 1
      %s224 = scalar_select %p221, %s222, %s223
      %p227 = pneg %p221
      %p228 = scmp.eq.s32.totalorder %s24, 1
      %p229 = por %p227, %p228
      %p230 = scmp.ne.s32.totalorder %s222, %s225
      %p231 = scmp.eq.s32.totalorder %s24, 0
      %p232 = por %p230, %p231
      %p233 = scmp.ne.s32.totalorder %s222, %s225
      %p234 = scmp.eq.s32.totalorder %s29, 1
      %p235 = por %p233, %p234
      %p236 = scmp.ne.s32.totalorder %s225, %s226
      %p237 = scmp.eq.s32.totalorder %s29, 0
      %p238 = por %p236, %p237
      %p239 = scmp.ne.s32.totalorder %s225, %s226
      %p240 = scmp.eq.s32.totalorder %s30, 1
      %p241 = por %p239, %p240
      %p243 = scmp.ne.s32.totalorder %s226, %s242
      %p244 = scmp.eq.s32.totalorder %s30, 0
      %p245 = por %p243, %p244
      %p246 = scmp.le.s32.totalorder 1, %s24
      %p247 = scmp.lt.s32.totalorder %s24, 3
      %p248 = pnand %p246, %p247
      %p249 = pneg %p248
      // Predicated region
      $region9: #{tpu_custom_call.1} parent=5 // pred_check
        _
      $region10: #{tpu_custom_call.1} parent=5 // pred_check_branch
        %251 = sbr.rel (%p248) target = $region12
      $region11: #{tpu_custom_call.1} parent=5 // pred_region
        %s252 = ssub.s32 %s24, 1
        // Predicated region
        $region13: #{tpu_custom_call.1} parent=11 // pred_check
          %p253 = pneg %p149
        $region14: #{tpu_custom_call.1} parent=11 // pred_check_branch
          %255 = sbr.rel (%p253) target = $region16
        $region15: #{tpu_custom_call.1} parent=11 // pred_region
          %s257 = ssub.s32 2048, 2048
          %258 = vsyncadd [#allocation6], %s257
          %s259 = sshll.u32 [#allocation7], 4
          %s260 = int_to_ptr.vmem [resolvable:$true] %s259
          %265 = dma.hbm_to_vmem [thread:$0]  %s4, 2048, %s260, [#allocation6], 64, 64, 4
        $region16: #{tpu_custom_call.1} parent=11 // pred_fallthru
          _
        // Predicated region
        $region17: #{tpu_custom_call.1} parent=11 // pred_check
          %p266 = pneg %p170
        $region18: #{tpu_custom_call.1} parent=11 // pred_check_branch
          %268 = sbr.rel (%p266) target = $region20
        $region19: #{tpu_custom_call.1} parent=11 // pred_region
          %s270 = ssub.s32 32, 32
          %271 = vsyncadd [#allocation9], %s270
          %s272 = sshll.u32 [#allocation8], 4
          %s273 = int_to_ptr.vmem [resolvable:$true] %s272
          %278 = dma.hbm_to_vmem [thread:$0]  %s5, 32, %s273, [#allocation9], 16, 16, 1
        $region20: #{tpu_custom_call.1} parent=11 // pred_fallthru
          _
        // Predicated region
        $region21: #{tpu_custom_call.1} parent=11 // pred_check
          %p279 = pneg %p191
        $region22: #{tpu_custom_call.1} parent=11 // pred_check_branch
          %281 = sbr.rel (%p279) target = $region24
        $region23: #{tpu_custom_call.1} parent=11 // pred_region
          _
        $region24: #{tpu_custom_call.1} parent=11 // pred_fallthru
          _
        // Predicated region
        $region25: #{tpu_custom_call.1} parent=11 // pred_check
          %p282 = pneg %p212
        $region26: #{tpu_custom_call.1} parent=11 // pred_check_branch
          %284 = sbr.rel (%p282) target = $region28
        $region27: #{tpu_custom_call.1} parent=11 // pred_region
          _
        $region28: #{tpu_custom_call.1} parent=11 // pred_fallthru
          _
      $region12: #{tpu_custom_call.1} parent=5 // pred_fallthru
        _
      %p285 = scmp.lt.s32.totalorder %s24, 2
      // Predicated region
      $region29: #{tpu_custom_call.1} parent=5 // pred_check
        %p286 = pneg %p285
      $region30: #{tpu_custom_call.1} parent=5 // pred_check_branch
        %288 = sbr.rel (%p286) target = $region32
      $region31: #{tpu_custom_call.1} parent=5 // pred_region
        // Predicated region
        $region33: #{tpu_custom_call.1} parent=31 // pred_check
          %p289 = pneg %p44
        $region34: #{tpu_custom_call.1} parent=31 // pred_check_branch
          %291 = sbr.rel (%p289) target = $region36
        $region35: #{tpu_custom_call.1} parent=31 // pred_region
          %s292 = sand.u32 %s34, 1
          %s293 = scalar_lea.sflag [#allocation3], %s292
          %s294 = sand.u32 %s34, 1
          %s295 = smul.addr %s294, 8
          %s296 = scalar_lea.vmem [#allocation2], %s295
          %s298 = ssub.s32 128, 128
          %299 = vsyncadd %s293, %s298
          %s300 = smul.addr %s24, 128
          %s301 = scalar_lea.hbm %s0, %s300
          %s303 = sshll.u32 %s296, 4
          %s304 = int_to_ptr.vmem [resolvable:$true] %s303
          %306 = dma.hbm_to_vmem [thread:$0]  %s301, 128, %s304, %s293
        $region36: #{tpu_custom_call.1} parent=31 // pred_fallthru
          _
        // Predicated region
        $region37: #{tpu_custom_call.1} parent=31 // pred_check
          %p307 = pneg %p70
        $region38: #{tpu_custom_call.1} parent=31 // pred_check_branch
          %309 = sbr.rel (%p307) target = $region40
        $region39: #{tpu_custom_call.1} parent=31 // pred_region
          %p310 = scmp.lt.s32.totalorder %s24, 1
          %s311 = scalar_select %p310, %s24, 1
          %s312 = smul.addr %s311, 8
          %s313 = scalar_lea.vmem %s1, %s312
        $region40: #{tpu_custom_call.1} parent=31 // pred_fallthru
          _
        // Predicated region
        $region41: #{tpu_custom_call.1} parent=31 // pred_check
          %p314 = pneg %p96
        $region42: #{tpu_custom_call.1} parent=31 // pred_check_branch
          %316 = sbr.rel (%p314) target = $region44
        $region43: #{tpu_custom_call.1} parent=31 // pred_region
          %p317 = scmp.lt.s32.totalorder %s24, 1
          %s318 = scalar_select %p317, %s24, 1
          %s319 = smul.addr %s318, 8
          %s320 = scalar_lea.vmem %s2, %s319
        $region44: #{tpu_custom_call.1} parent=31 // pred_fallthru
          _
        // Predicated region
        $region45: #{tpu_custom_call.1} parent=31 // pred_check
          %p321 = pneg %p122
        $region46: #{tpu_custom_call.1} parent=31 // pred_check_branch
          %323 = sbr.rel (%p321) target = $region48
        $region47: #{tpu_custom_call.1} parent=31 // pred_region
          %s324 = sand.u32 %s24, 1
          %s325 = scalar_lea.sflag [#allocation6], %s324
          %s326 = sand.u32 %s112, 1
          %s327 = scalar_lea.vmem [#allocation5], %s326
          %s329 = ssub.s32 16, 16
          %330 = vsyncadd %s325, %s329
          %s331 = smul.addr %s24, 16
          %s332 = scalar_lea.hbm %s3, %s331
          %s334 = sshll.u32 %s327, 4
          %s335 = int_to_ptr.vmem [resolvable:$true] %s334
          %337 = dma.hbm_to_vmem [thread:$0]  %s332, 16, %s335, %s325
        $region48: #{tpu_custom_call.1} parent=31 // pred_fallthru
          _
      $region32: #{tpu_custom_call.1} parent=5 // pred_fallthru
        _
      %p338 = scmp.le.s32.totalorder 1, %s24
      %p339 = scmp.lt.s32.totalorder %s24, 3
      %p340 = pnand %p338, %p339
      %p341 = pneg %p340
      // Predicated region
      $region49: #{tpu_custom_call.1} parent=5 // pred_check
        _
      $region50: #{tpu_custom_call.1} parent=5 // pred_check_branch
        %343 = sbr.rel (%p340) target = $region52
      $region51: #{tpu_custom_call.1} parent=5 // pred_region
        %s344 = ssub.s32 %s24, 1
        %s345 = sand.u32 %s37, 1
        %s346 = scalar_lea.sflag [#allocation3], %s345
        %s347 = sand.u32 %s37, 1
        %s348 = smul.addr %s347, 8
        %s349 = scalar_lea.vmem [#allocation2], %s348
        // Predicated region
        $region53: #{tpu_custom_call.1} parent=51 // pred_check
          %p350 = pneg %p50
        $region54: #{tpu_custom_call.1} parent=51 // pred_check_branch
          %352 = sbr.rel (%p350) target = $region56
        $region55: #{tpu_custom_call.1} parent=51 // pred_region
          %353 = dma.done %s346, 128
        $region56: #{tpu_custom_call.1} parent=51 // pred_fallthru
          _
        %s354 = sand.u32 %s29, 1
        %s355 = scalar_lea.sflag [#allocation6], %s354
        %s356 = sand.u32 %s115, 1
        %s357 = scalar_lea.vmem [#allocation5], %s356
        // Predicated region
        $region57: #{tpu_custom_call.1} parent=51 // pred_check
          %p358 = pneg %p128
        $region58: #{tpu_custom_call.1} parent=51 // pred_check_branch
          %360 = sbr.rel (%p358) target = $region60
        $region59: #{tpu_custom_call.1} parent=51 // pred_region
          %361 = dma.done %s355, 16
        $region60: #{tpu_custom_call.1} parent=51 // pred_fallthru
          _
        // Predicated region
        $region61: #{tpu_custom_call.1} parent=51 // pred_check
          %p362 = pneg %p149
        $region62: #{tpu_custom_call.1} parent=51 // pred_check_branch
          %364 = sbr.rel (%p362) target = $region64
        $region63: #{tpu_custom_call.1} parent=51 // pred_region
          %365 = dma.done [#allocation6], 2048
        $region64: #{tpu_custom_call.1} parent=51 // pred_fallthru
          _
        // Predicated region
        $region65: #{tpu_custom_call.1} parent=51 // pred_check
          %p366 = pneg %p170
        $region66: #{tpu_custom_call.1} parent=51 // pred_check_branch
          %368 = sbr.rel (%p366) target = $region68
        $region67: #{tpu_custom_call.1} parent=51 // pred_region
          %369 = dma.done [#allocation9], 32
        $region68: #{tpu_custom_call.1} parent=51 // pred_fallthru
          _
        %s370 = sand.u32 %s37, 1
        %s371 = scalar_lea.sflag [#allocation3], %s370
        %s372 = sand.u32 %s37, 1
        %s373 = smul.addr %s372, 8
        %s374 = scalar_lea.vmem [#allocation2], %s373
        %p375 = pneg %p50
        %p376 = pneg %p47
        %p377 = scmp.lt.s32.totalorder %s29, 1
        %s378 = scalar_select %p377, %s29, 1
        %s379 = smul.addr %s378, 8
        %s380 = scalar_lea.vmem %s1, %s379
        %p381 = pneg %p76
        %p382 = pneg %p73
        %p383 = scmp.lt.s32.totalorder %s29, 1
        %s384 = scalar_select %p383, %s29, 1
        %s385 = smul.addr %s384, 8
        %s386 = scalar_lea.vmem %s2, %s385
        %p387 = pneg %p102
        %p388 = pneg %p99
        %s389 = sand.u32 %s29, 1
        %s390 = scalar_lea.sflag [#allocation6], %s389
        %s391 = sand.u32 %s115, 1
        %s392 = scalar_lea.vmem [#allocation5], %s391
        %p393 = pneg %p128
        %p394 = pneg %p125
        %p395 = pneg %p149
        %p396 = pneg %p146
        %p397 = pneg %p170
        %p398 = pneg %p167
        %p399 = pneg %p191
        %p400 = pneg %p188
        %p401 = pneg %p212
        %p402 = pneg %p209
        %p403 = pneg %p238
        %p404 = pneg %p235
        %s405 = sand.u32 %s225, 1
        %s406 = scalar_lea.sflag [#allocation4], %s405
        %s407 = sand.u32 %s225, 1
        %s408 = scalar_lea.vmem [#allocation10], %s407
        %p409 = scmp.lt.s32.totalorder %s29, 1
        %s410 = scalar_select %p409, %s29, 1
        %s411 = smul.addr %s410, 8
        %s412 = scalar_lea.vmem %s1, %s411
        %p413 = scmp.lt.s32.totalorder %s29, 1
        %s414 = scalar_select %p413, %s29, 1
        %s415 = smul.addr %s414, 8
        %s416 = scalar_lea.vmem %s2, %s415
        %v418 = vld [vmem:[%s349] sm:$0xff]
        %v419 = vld [vmem:[%s416] sm:$0xff]
        %v420 = vld [vmem:[%s357] sm:$0x1]
        %v421 = vld [vmem:[%s412] sm:$0xff]
        %v422 = vlaneseq
        %v423 = vand.u32 %v422, 127
        %424 = vset.pattern.permute.xlu0 0
        %425 = vperm.xlu0 %424, %v421
        %v426 = vpop.permute.xlu0 %425
        %vm427 = vcmp.eq.s32.totalorder %v426, %v423
        %v428 = vsel %vm427, 1, 0
        %v429 = vcvt.s32.f32 %v428
        %v430 = vadd.f32 %v429, 0.0
        %431 = vset.pattern.permute.xlu0 1
        %432 = vperm.xlu0 %431, %v421
        %v433 = vpop.permute.xlu0 %432
        %vm434 = vcmp.eq.s32.totalorder %v433, %v423
        %v435 = vsel %vm434, 1, 0
        %v436 = vcvt.s32.f32 %v435
        %v437 = vadd.f32 %v430, %v436
        %438 = vset.pattern.permute.xlu0 2
        %439 = vperm.xlu0 %438, %v421
        %v440 = vpop.permute.xlu0 %439
        %vm441 = vcmp.eq.s32.totalorder %v440, %v423
        %v442 = vsel %vm441, 1, 0
        %v443 = vcvt.s32.f32 %v442
        %v444 = vadd.f32 %v437, %v443
        %445 = vset.pattern.permute.xlu0 3
        %446 = vperm.xlu0 %445, %v421
        %v447 = vpop.permute.xlu0 %446
        %vm448 = vcmp.eq.s32.totalorder %v447, %v423
        %v449 = vsel %vm448, 1, 0
        %v450 = vcvt.s32.f32 %v449
        %v451 = vadd.f32 %v444, %v450
        %v453 = vlaneseq
        %v454 = vshrl.u32 %v453, 7
        %v455 = vsub.s32 0, %v454
        %v456 = vrot.slane %v420, %v455
        %v458 = vmul.f32 %v451, %v456
        %v459 = vpack.c.bf16 %v458, %v458
        %v460 = vld [vmem:[#allocation7] sm:$0xf]
        %v461 = vld [vmem:[#allocation7 + $0x4] sm:$0xf]
        %v462 = vld [vmem:[#allocation7 + $0x8] sm:$0xf]
        %v463 = vld [vmem:[#allocation7 + $0xc] sm:$0xf]
        %v464 = vld [vmem:[#allocation7 + $0x10] sm:$0xf]
        %v465 = vld [vmem:[#allocation7 + $0x14] sm:$0xf]
        %v466 = vld [vmem:[#allocation7 + $0x18] sm:$0xf]
        %v467 = vld [vmem:[#allocation7 + $0x1c] sm:$0xf]
        %v468 = vld [vmem:[#allocation7 + $0x20] sm:$0xf]
        %v469 = vld [vmem:[#allocation7 + $0x24] sm:$0xf]
        %v470 = vld [vmem:[#allocation7 + $0x28] sm:$0xf]
        %v471 = vld [vmem:[#allocation7 + $0x2c] sm:$0xf]
        %v472 = vld [vmem:[#allocation7 + $0x30] sm:$0xf]
        %v473 = vld [vmem:[#allocation7 + $0x34] sm:$0xf]
        %v474 = vld [vmem:[#allocation7 + $0x38] sm:$0xf]
        %v475 = vld [vmem:[#allocation7 + $0x3c] sm:$0xf]
        %v476 = vld [vmem:[#allocation8] sm:$0x1]
        %v477 = vpack.c.bf16 %v418, %v418
        %vm478 = vcmask 64512
        %v480 = vsel %vm478, %v459, 0
        %vm482 = vcmask 1043456
        %v484 = vsel %vm482, %v477, 0
        %486 = vmatprep.subr.bf16.mxu0 0
        %487 = vmatpush1.bf16.msra.mxu0 %v484
        %488 = vmatprep.subr.bf16.mxu0 0
        %489 = vmatpush1.bf16.msra.mxu0 0
        %490 = vmatprep.subr.bf16.mxu0 0
        %491 = vmatpush1.bf16.msra.mxu0 0
        %492 = vmatprep.subr.bf16.mxu0 0
        %493 = vmatpush1.bf16.msra.mxu0 0
        %494 = vmatprep.subr.bf16.mxu0 0
        %495 = vmatpush1.bf16.msra.mxu0 0
        %496 = vmatprep.subr.bf16.mxu0 0
        %497 = vmatpush1.bf16.msra.mxu0 0
        %498 = vmatprep.subr.bf16.mxu0 0
        %499 = vmatpush1.bf16.msra.mxu0 0
        %500 = vmatprep.subr.bf16.mxu0 0
        %501 = vmatpush1.bf16.msra.mxu0 0
        %502 = vmatprep.subr.bf16.mxu0 0
        %503 = vmatpush1.bf16.msra.mxu0 0
        %504 = vmatprep.subr.bf16.mxu0 0
        %505 = vmatpush1.bf16.msra.mxu0 0
        %506 = vmatprep.subr.bf16.mxu0 0
        %507 = vmatpush1.bf16.msra.mxu0 0
        %508 = vmatprep.subr.bf16.mxu0 0
        %509 = vmatpush1.bf16.msra.mxu0 0
        %510 = vmatprep.subr.bf16.mxu0 0
        %511 = vmatpush1.bf16.msra.mxu0 0
        %512 = vmatprep.subr.bf16.mxu0 0
        %513 = vmatpush1.bf16.msra.mxu0 0
        %514 = vmatprep.subr.bf16.mxu0 0
        %515 = vmatpush1.bf16.msra.mxu0 0
        %516 = vmatprep.subr.bf16.mxu0 0
        %517 = vmatpush1.bf16.msra.mxu0 0
        %518 = vmatprep.mubr.bf16.mxu0 0
        %519 = vmatmul.mubr.bf16.gmra.mrb[0].mxu0 %v480
        %v520 = vpop.f32.mrb[0].mxu0
        %v521 = vadd.f32 0.0, %v520
        %v522 = vpop.f32.mrb[0].mxu0
        %v523 = vpop.f32.mrb[0].mxu0
        %v524 = vpop.f32.mrb[0].mxu0
        %525 = vdwg.mxu0
        %v526 = vadd.f32 %v418, %v521
        %v527 = vpack.c.bf16 %v526, %v526
        %v529 = vlaneseq
        %v530 = vshrl.u32 %v529, 7
        %v531 = vsub.s32 0, %v530
        %v532 = vrot.slane %v476, %v531
        %v550 = vunpack.c.l.b16 %v460
        %v551 = vunpack.c.l.b16 %v461
        %v552 = vunpack.c.l.b16 %v462
        %v553 = vunpack.c.l.b16 %v463
        %v554 = vunpack.c.l.b16 %v464
        %v555 = vunpack.c.l.b16 %v465
        %v556 = vunpack.c.l.b16 %v466
        %v557 = vunpack.c.l.b16 %v467
        %v558 = vunpack.c.l.b16 %v468
        %v559 = vunpack.c.l.b16 %v469
        %v560 = vunpack.c.l.b16 %v470
        %v561 = vunpack.c.l.b16 %v471
        %v562 = vunpack.c.l.b16 %v472
        %v563 = vunpack.c.l.b16 %v473
        %v564 = vunpack.c.l.b16 %v474
        %v565 = vunpack.c.l.b16 %v475
        %v566 = vpack.c.b16 %v551, %v550
        %v567 = vpack.c.b16 %v553, %v552
        %v568 = vpack.c.b16 %v555, %v554
        %v569 = vpack.c.b16 %v557, %v556
        %v570 = vpack.c.b16 %v559, %v558
        %v571 = vpack.c.b16 %v561, %v560
        %v572 = vpack.c.b16 %v563, %v562
        %v573 = vpack.c.b16 %v565, %v564
        %582 = vmatprep.subr.bf16.mxu0 0
        %583 = vmatpush1.bf16.msra.mxu0 %v566
        %584 = vmatprep.subr.bf16.mxu0 0
        %585 = vmatpush1.bf16.msra.mxu0 %v567
        %586 = vmatprep.subr.bf16.mxu0 0
        %587 = vmatpush1.bf16.msra.mxu0 %v568
        %588 = vmatprep.subr.bf16.mxu0 0
        %589 = vmatpush1.bf16.msra.mxu0 %v569
        %590 = vmatprep.subr.bf16.mxu0 0
        %591 = vmatpush1.bf16.msra.mxu0 %v570
        %592 = vmatprep.subr.bf16.mxu0 0
        %593 = vmatpush1.bf16.msra.mxu0 %v571
        %594 = vmatprep.subr.bf16.mxu0 0
        %595 = vmatpush1.bf16.msra.mxu0 %v572
        %596 = vmatprep.subr.bf16.mxu0 0
        %597 = vmatpush1.bf16.msra.mxu0 %v573
        %598 = vmatprep.subr.bf16.mxu0 0
        %599 = vmatpush1.bf16.msra.mxu0 0
        %600 = vmatprep.subr.bf16.mxu0 0
        %601 = vmatpush1.bf16.msra.mxu0 0
        %602 = vmatprep.subr.bf16.mxu0 0
        %603 = vmatpush1.bf16.msra.mxu0 0
        %604 = vmatprep.subr.bf16.mxu0 0
        %605 = vmatpush1.bf16.msra.mxu0 0
        %606 = vmatprep.subr.bf16.mxu0 0
        %607 = vmatpush1.bf16.msra.mxu0 0
        %608 = vmatprep.subr.bf16.mxu0 0
        %609 = vmatpush1.bf16.msra.mxu0 0
        %610 = vmatprep.subr.bf16.mxu0 0
        %611 = vmatpush1.bf16.msra.mxu0 0
        %612 = vmatprep.subr.bf16.mxu0 0
        %613 = vmatpush1.bf16.msra.mxu0 0
        %614 = vmatprep.mubr.bf16.mxu0 0
        %615 = vmatmul.mubr.bf16.gmra.mrb[0].mxu0 %v527
        %v616 = vpop.f32.mrb[0].mxu0
        %v617 = vadd.f32 %v532, %v616
        %v618 = vpop.f32.mrb[0].mxu0
        %v619 = vpop.f32.mrb[0].mxu0
        %v620 = vpop.f32.mrb[0].mxu0
        %621 = vdwg.mxu0
        %v622 = vmax.f32 %v617, 0.0
        %624 = vset.pattern.permute.xlu0 0
        %625 = vperm.xlu0 %624, %v419
        %v626 = vpop.permute.xlu0 %625
        %v628 = vmul.f32 %v622, %v626
        %s629 = scalar_lea.vmem [#allocation7], 64
        %v630 = vld [vmem:[%s629] sm:$0xf]
        %v631 = vld [vmem:[%s629 + $0x4] sm:$0xf]
        %v632 = vld [vmem:[%s629 + $0x8] sm:$0xf]
        %v633 = vld [vmem:[%s629 + $0xc] sm:$0xf]
        %v634 = vld [vmem:[%s629 + $0x10] sm:$0xf]
        %v635 = vld [vmem:[%s629 + $0x14] sm:$0xf]
        %v636 = vld [vmem:[%s629 + $0x18] sm:$0xf]
        %v637 = vld [vmem:[%s629 + $0x1c] sm:$0xf]
        %v638 = vld [vmem:[%s629 + $0x20] sm:$0xf]
        %v639 = vld [vmem:[%s629 + $0x24] sm:$0xf]
        %v640 = vld [vmem:[%s629 + $0x28] sm:$0xf]
        %v641 = vld [vmem:[%s629 + $0x2c] sm:$0xf]
        %v642 = vld [vmem:[%s629 + $0x30] sm:$0xf]
        %v643 = vld [vmem:[%s629 + $0x34] sm:$0xf]
        %v644 = vld [vmem:[%s629 + $0x38] sm:$0xf]
        %v645 = vld [vmem:[%s629 + $0x3c] sm:$0xf]
        %s646 = scalar_lea.vmem [#allocation8], 1
        %v647 = vld [vmem:[%s646] sm:$0x1]
        %v648 = vpack.c.bf16 %v628, %v628
        %v650 = vsel %vm482, %v648, 0
        %652 = vmatprep.subr.bf16.mxu0 0
        %653 = vmatpush1.bf16.msra.mxu0 %v650
        %654 = vmatprep.subr.bf16.mxu0 0
        %655 = vmatpush1.bf16.msra.mxu0 0
        %656 = vmatprep.subr.bf16.mxu0 0
        %657 = vmatpush1.bf16.msra.mxu0 0
        %658 = vmatprep.subr.bf16.mxu0 0
        %659 = vmatpush1.bf16.msra.mxu0 0
        %660 = vmatprep.subr.bf16.mxu0 0
        %661 = vmatpush1.bf16.msra.mxu0 0
        %662 = vmatprep.subr.bf16.mxu0 0
        %663 = vmatpush1.bf16.msra.mxu0 0
        %664 = vmatprep.subr.bf16.mxu0 0
        %665 = vmatpush1.bf16.msra.mxu0 0
        %666 = vmatprep.subr.bf16.mxu0 0
        %667 = vmatpush1.bf16.msra.mxu0 0
        %668 = vmatprep.subr.bf16.mxu0 0
        %669 = vmatpush1.bf16.msra.mxu0 0
        %670 = vmatprep.subr.bf16.mxu0 0
        %671 = vmatpush1.bf16.msra.mxu0 0
        %672 = vmatprep.subr.bf16.mxu0 0
        %673 = vmatpush1.bf16.msra.mxu0 0
        %674 = vmatprep.subr.bf16.mxu0 0
        %675 = vmatpush1.bf16.msra.mxu0 0
        %676 = vmatprep.subr.bf16.mxu0 0
        %677 = vmatpush1.bf16.msra.mxu0 0
        %678 = vmatprep.subr.bf16.mxu0 0
        %679 = vmatpush1.bf16.msra.mxu0 0
        %680 = vmatprep.subr.bf16.mxu0 0
        %681 = vmatpush1.bf16.msra.mxu0 0
        %682 = vmatprep.subr.bf16.mxu0 0
        %683 = vmatpush1.bf16.msra.mxu0 0
        %684 = vmatprep.mubr.bf16.mxu0 0
        %685 = vmatmul.mubr.bf16.gmra.mrb[0].mxu0 %v480
        %v686 = vpop.f32.mrb[0].mxu0
        %v687 = vadd.f32 0.0, %v686
        %v688 = vpop.f32.mrb[0].mxu0
        %v689 = vpop.f32.mrb[0].mxu0
        %v690 = vpop.f32.mrb[0].mxu0
        %691 = vdwg.mxu0
        %v692 = vadd.f32 %v628, %v687
        %v693 = vpack.c.bf16 %v692, %v692
        %v695 = vlaneseq
        %v696 = vshrl.u32 %v695, 7
        %v697 = vsub.s32 0, %v696
        %v698 = vrot.slane %v647, %v697
        %v716 = vunpack.c.l.b16 %v630
        %v717 = vunpack.c.l.b16 %v631
        %v718 = vunpack.c.l.b16 %v632
        %v719 = vunpack.c.l.b16 %v633
        %v720 = vunpack.c.l.b16 %v634
        %v721 = vunpack.c.l.b16 %v635
        %v722 = vunpack.c.l.b16 %v636
        %v723 = vunpack.c.l.b16 %v637
        %v724 = vunpack.c.l.b16 %v638
        %v725 = vunpack.c.l.b16 %v639
        %v726 = vunpack.c.l.b16 %v640
        %v727 = vunpack.c.l.b16 %v641
        %v728 = vunpack.c.l.b16 %v642
        %v729 = vunpack.c.l.b16 %v643
        %v730 = vunpack.c.l.b16 %v644
        %v731 = vunpack.c.l.b16 %v645
        %v732 = vpack.c.b16 %v717, %v716
        %v733 = vpack.c.b16 %v719, %v718
        %v734 = vpack.c.b16 %v721, %v720
        %v735 = vpack.c.b16 %v723, %v722
        %v736 = vpack.c.b16 %v725, %v724
        %v737 = vpack.c.b16 %v727, %v726
        %v738 = vpack.c.b16 %v729, %v728
        %v739 = vpack.c.b16 %v731, %v730
        %748 = vmatprep.subr.bf16.mxu0 0
        %749 = vmatpush1.bf16.msra.mxu0 %v732
        %750 = vmatprep.subr.bf16.mxu0 0
        %751 = vmatpush1.bf16.msra.mxu0 %v733
        %752 = vmatprep.subr.bf16.mxu0 0
        %753 = vmatpush1.bf16.msra.mxu0 %v734
        %754 = vmatprep.subr.bf16.mxu0 0
        %755 = vmatpush1.bf16.msra.mxu0 %v735
        %756 = vmatprep.subr.bf16.mxu0 0
        %757 = vmatpush1.bf16.msra.mxu0 %v736
        %758 = vmatprep.subr.bf16.mxu0 0
        %759 = vmatpush1.bf16.msra.mxu0 %v737
        %760 = vmatprep.subr.bf16.mxu0 0
        %761 = vmatpush1.bf16.msra.mxu0 %v738
        %762 = vmatprep.subr.bf16.mxu0 0
        %763 = vmatpush1.bf16.msra.mxu0 %v739
        %764 = vmatprep.subr.bf16.mxu0 0
        %765 = vmatpush1.bf16.msra.mxu0 0
        %766 = vmatprep.subr.bf16.mxu0 0
        %767 = vmatpush1.bf16.msra.mxu0 0
        %768 = vmatprep.subr.bf16.mxu0 0
        %769 = vmatpush1.bf16.msra.mxu0 0
        %770 = vmatprep.subr.bf16.mxu0 0
        %771 = vmatpush1.bf16.msra.mxu0 0
        %772 = vmatprep.subr.bf16.mxu0 0
        %773 = vmatpush1.bf16.msra.mxu0 0
        %774 = vmatprep.subr.bf16.mxu0 0
        %775 = vmatpush1.bf16.msra.mxu0 0
        %776 = vmatprep.subr.bf16.mxu0 0
        %777 = vmatpush1.bf16.msra.mxu0 0
        %778 = vmatprep.subr.bf16.mxu0 0
        %779 = vmatpush1.bf16.msra.mxu0 0
        %780 = vmatprep.mubr.bf16.mxu0 0
        %781 = vmatmul.mubr.bf16.gmra.mrb[0].mxu0 %v693
        %v782 = vpop.f32.mrb[0].mxu0
        %v783 = vadd.f32 %v698, %v782
        %v784 = vpop.f32.mrb[0].mxu0
        %v785 = vpop.f32.mrb[0].mxu0
        %v786 = vpop.f32.mrb[0].mxu0
        %787 = vdwg.mxu0
        %v788 = vmax.f32 %v783, 0.0
        %v789 = vmul.f32 %v788, %v626
        %v790 = vld [vmem:[%s6] sm:$0xf]
        %v791 = vld [vmem:[%s6 + $0x4] sm:$0xf]
        %v792 = vld [vmem:[%s6 + $0x8] sm:$0xf]
        %v793 = vld [vmem:[%s6 + $0xc] sm:$0xf]
        %v794 = vld [vmem:[%s6 + $0x10] sm:$0xf]
        %v795 = vld [vmem:[%s6 + $0x14] sm:$0xf]
        %v796 = vld [vmem:[%s6 + $0x18] sm:$0xf]
        %v797 = vld [vmem:[%s6 + $0x1c] sm:$0xf]
        %v798 = vld [vmem:[%s6 + $0x20] sm:$0xf]
        %v799 = vld [vmem:[%s6 + $0x24] sm:$0xf]
        %v800 = vld [vmem:[%s6 + $0x28] sm:$0xf]
        %v801 = vld [vmem:[%s6 + $0x2c] sm:$0xf]
        %v802 = vld [vmem:[%s6 + $0x30] sm:$0xf]
        %v803 = vld [vmem:[%s6 + $0x34] sm:$0xf]
        %v804 = vld [vmem:[%s6 + $0x38] sm:$0xf]
        %v805 = vld [vmem:[%s6 + $0x3c] sm:$0xf]
        %v806 = vld [vmem:[%s7] sm:$0x1]
        %v807 = vpack.c.bf16 %v789, %v789
        %v809 = vlaneseq
        %v810 = vshrl.u32 %v809, 7
        %v811 = vsub.s32 0, %v810
        %v812 = vrot.slane %v806, %v811
        %v830 = vunpack.c.l.b16 %v790
        %v831 = vunpack.c.l.b16 %v791
        %v832 = vunpack.c.l.b16 %v792
        %v833 = vunpack.c.l.b16 %v793
        %v834 = vunpack.c.l.b16 %v794
        %v835 = vunpack.c.l.b16 %v795
        %v836 = vunpack.c.l.b16 %v796
        %v837 = vunpack.c.l.b16 %v797
        %v838 = vunpack.c.l.b16 %v798
        %v839 = vunpack.c.l.b16 %v799
        %v840 = vunpack.c.l.b16 %v800
        %v841 = vunpack.c.l.b16 %v801
        %v842 = vunpack.c.l.b16 %v802
        %v843 = vunpack.c.l.b16 %v803
        %v844 = vunpack.c.l.b16 %v804
        %v845 = vunpack.c.l.b16 %v805
        %v846 = vpack.c.b16 %v831, %v830
        %v847 = vpack.c.b16 %v833, %v832
        %v848 = vpack.c.b16 %v835, %v834
        %v849 = vpack.c.b16 %v837, %v836
        %v850 = vpack.c.b16 %v839, %v838
        %v851 = vpack.c.b16 %v841, %v840
        %v852 = vpack.c.b16 %v843, %v842
        %v853 = vpack.c.b16 %v845, %v844
        %862 = vmatprep.subr.bf16.mxu0 0
        %863 = vmatpush1.bf16.msra.mxu0 %v846
        %864 = vmatprep.subr.bf16.mxu0 0
        %865 = vmatpush1.bf16.msra.mxu0 %v847
        %866 = vmatprep.subr.bf16.mxu0 0
        %867 = vmatpush1.bf16.msra.mxu0 %v848
        %868 = vmatprep.subr.bf16.mxu0 0
        %869 = vmatpush1.bf16.msra.mxu0 %v849
        %870 = vmatprep.subr.bf16.mxu0 0
        %871 = vmatpush1.bf16.msra.mxu0 %v850
        %872 = vmatprep.subr.bf16.mxu0 0
        %873 = vmatpush1.bf16.msra.mxu0 %v851
        %874 = vmatprep.subr.bf16.mxu0 0
        %875 = vmatpush1.bf16.msra.mxu0 %v852
        %876 = vmatprep.subr.bf16.mxu0 0
        %877 = vmatpush1.bf16.msra.mxu0 %v853
        %878 = vmatprep.subr.bf16.mxu0 0
        %879 = vmatpush1.bf16.msra.mxu0 0
        %880 = vmatprep.subr.bf16.mxu0 0
        %881 = vmatpush1.bf16.msra.mxu0 0
        %882 = vmatprep.subr.bf16.mxu0 0
        %883 = vmatpush1.bf16.msra.mxu0 0
        %884 = vmatprep.subr.bf16.mxu0 0
        %885 = vmatpush1.bf16.msra.mxu0 0
        %886 = vmatprep.subr.bf16.mxu0 0
        %887 = vmatpush1.bf16.msra.mxu0 0
        %888 = vmatprep.subr.bf16.mxu0 0
        %889 = vmatpush1.bf16.msra.mxu0 0
        %890 = vmatprep.subr.bf16.mxu0 0
        %891 = vmatpush1.bf16.msra.mxu0 0
        %892 = vmatprep.subr.bf16.mxu0 0
        %893 = vmatpush1.bf16.msra.mxu0 0
        %894 = vmatprep.mubr.bf16.mxu0 0
        %895 = vmatmul.mubr.bf16.gmra.mrb[0].mxu0 %v807
        %v896 = vpop.f32.mrb[0].mxu0
        %v897 = vadd.f32 %v812, %v896
        %v898 = vpop.f32.mrb[0].mxu0
        %v899 = vpop.f32.mrb[0].mxu0
        %v900 = vpop.f32.mrb[0].mxu0
        %901 = vdwg.mxu0
        %v902 = vmax.f32 %v897, 0.0
        %vm903 = vcmask 57344
        %v904 = vsel %vm903, %v420, 0.0
        %905 = vadd.xlane.f32.xlu0 %v904
        %v906 = vpop.xlane.xlu0 %905
        %v907 = vmax.f32 %v906, 1.0
        %v908 = vsel %vm478, %v420, 0
        %910 = vmatprep.subr.mxu0 0.0
        %911 = vmatpush1.msra.mxu0 %v789
        %912 = vmatprep.subr.mxu0 0.0
        %913 = vmatpush1.msra.mxu0 0.0
        %914 = vmatprep.subr.mxu0 0.0
        %915 = vmatpush1.msra.mxu0 0.0
        %916 = vmatprep.subr.mxu0 0.0
        %917 = vmatpush1.msra.mxu0 0.0
        %918 = vmatprep.subr.mxu0 0.0
        %919 = vmatpush1.msra.mxu0 0.0
        %920 = vmatprep.subr.mxu0 0.0
        %921 = vmatpush1.msra.mxu0 0.0
        %922 = vmatprep.subr.mxu0 0.0
        %923 = vmatpush1.msra.mxu0 0.0
        %924 = vmatprep.subr.mxu0 0.0
        %925 = vmatpush1.msra.mxu0 0.0
        %926 = vmatprep.subr.mxu0 0.0
        %927 = vmatpush1.msra.mxu0 0.0
        %928 = vmatprep.subr.mxu0 0.0
        %929 = vmatpush1.msra.mxu0 0.0
        %930 = vmatprep.subr.mxu0 0.0
        %931 = vmatpush1.msra.mxu0 0.0
        %932 = vmatprep.subr.mxu0 0.0
        %933 = vmatpush1.msra.mxu0 0.0
        %934 = vmatprep.subr.mxu0 0.0
        %935 = vmatpush1.msra.mxu0 0.0
        %936 = vmatprep.subr.mxu0 0.0
        %937 = vmatpush1.msra.mxu0 0.0
        %938 = vmatprep.subr.mxu0 0.0
        %939 = vmatpush1.msra.mxu0 0.0
        %940 = vmatprep.subr.mxu0 0.0
        %941 = vmatpush1.msra.mxu0 0.0
        %942 = vmatprep.subr.mxu0 0.0
        %943 = vmatpush1.msra.mxu0 0.0
        %944 = vmatprep.subr.mxu0 0.0
        %945 = vmatpush1.msra.mxu0 0.0
        %946 = vmatprep.subr.mxu0 0.0
        %947 = vmatpush1.msra.mxu0 0.0
        %948 = vmatprep.subr.mxu0 0.0
        %949 = vmatpush1.msra.mxu0 0.0
        %950 = vmatprep.subr.mxu0 0.0
        %951 = vmatpush1.msra.mxu0 0.0
        %952 = vmatprep.subr.mxu0 0.0
        %953 = vmatpush1.msra.mxu0 0.0
        %954 = vmatprep.subr.mxu0 0.0
        %955 = vmatpush1.msra.mxu0 0.0
        %956 = vmatprep.subr.mxu0 0.0
        %957 = vmatpush1.msra.mxu0 0.0
        %958 = vmatprep.subr.mxu0 0.0
        %959 = vmatpush1.msra.mxu0 0.0
        %960 = vmatprep.subr.mxu0 0.0
        %961 = vmatpush1.msra.mxu0 0.0
        %962 = vmatprep.subr.mxu0 0.0
        %963 = vmatpush1.msra.mxu0 0.0
        %964 = vmatprep.subr.mxu0 0.0
        %965 = vmatpush1.msra.mxu0 0.0
        %966 = vmatprep.subr.mxu0 0.0
        %967 = vmatpush1.msra.mxu0 0.0
        %968 = vmatprep.subr.mxu0 0.0
        %969 = vmatpush1.msra.mxu0 0.0
        %970 = vmatprep.subr.mxu0 0.0
        %971 = vmatpush1.msra.mxu0 0.0
        %972 = vmatprep.subr.mxu0 0.0
        %973 = vmatpush1.msra.mxu0 0.0
        %974 = vmatprep.mubr.f32.mxu0 0.0
        %975 = vmatmul.mubr.f32.gmra.mrb[0].mxu0 %v908
        %v976 = vpop.f32.mrb[0].mxu0
        %v977 = vadd.f32 0.0, %v976
        %v978 = vpop.f32.mrb[0].mxu0
        %979 = vdwg.mxu0
        %v980 = vrcp.pop %v907
        %v981 = vmul.f32 %v977, %v980
        %v982 = vpack.c.bf16 %v981, %v981
        %983 = vmatprep.subr.bf16.mxu0 0
        %984 = vmatpush1.bf16.msra.mxu0 %v846
        %985 = vmatprep.subr.bf16.mxu0 0
        %986 = vmatpush1.bf16.msra.mxu0 %v847
        %987 = vmatprep.subr.bf16.mxu0 0
        %988 = vmatpush1.bf16.msra.mxu0 %v848
        %989 = vmatprep.subr.bf16.mxu0 0
        %990 = vmatpush1.bf16.msra.mxu0 %v849
        %991 = vmatprep.subr.bf16.mxu0 0
        %992 = vmatpush1.bf16.msra.mxu0 %v850
        %993 = vmatprep.subr.bf16.mxu0 0
        %994 = vmatpush1.bf16.msra.mxu0 %v851
        %995 = vmatprep.subr.bf16.mxu0 0
        %996 = vmatpush1.bf16.msra.mxu0 %v852
        %997 = vmatprep.subr.bf16.mxu0 0
        %998 = vmatpush1.bf16.msra.mxu0 %v853
        %999 = vmatprep.subr.bf16.mxu0 0
        %1000 = vmatpush1.bf16.msra.mxu0 0
        %1001 = vmatprep.subr.bf16.mxu0 0
        %1002 = vmatpush1.bf16.msra.mxu0 0
        %1003 = vmatprep.subr.bf16.mxu0 0
        %1004 = vmatpush1.bf16.msra.mxu0 0
        %1005 = vmatprep.subr.bf16.mxu0 0
        %1006 = vmatpush1.bf16.msra.mxu0 0
        %1007 = vmatprep.subr.bf16.mxu0 0
        %1008 = vmatpush1.bf16.msra.mxu0 0
        %1009 = vmatprep.subr.bf16.mxu0 0
        %1010 = vmatpush1.bf16.msra.mxu0 0
        %1011 = vmatprep.subr.bf16.mxu0 0
        %1012 = vmatpush1.bf16.msra.mxu0 0
        %1013 = vmatprep.subr.bf16.mxu0 0
        %1014 = vmatpush1.bf16.msra.mxu0 0
        %1015 = vmatprep.mubr.bf16.mxu0 0
        %1016 = vmatmul.mubr.bf16.gmra.mrb[0].mxu0 %v982
        %v1017 = vpop.f32.mrb[0].mxu0
        %v1018 = vadd.f32 %v806, %v1017
        %v1019 = vpop.f32.mrb[0].mxu0
        %v1020 = vpop.f32.mrb[0].mxu0
        %v1021 = vpop.f32.mrb[0].mxu0
        %1022 = vdwg.mxu0
        %v1023 = vmax.f32 %v1018, 0.0
        %1024 = vmatprep.subr.mxu0 0.0
        %1025 = vmatpush1.xpose.msra.mxu0 %v902
        %1026 = vmatprep.subr.mxu0 0.0
        %1027 = vmatpush1.xpose.msra.mxu0 0.0
        %1028 = vmatprep.subr.mxu0 0.0
        %1029 = vmatpush1.xpose.msra.mxu0 0.0
        %1030 = vmatprep.subr.mxu0 0.0
        %1031 = vmatpush1.xpose.msra.mxu0 0.0
        %1032 = vmatprep.subr.mxu0 0.0
        %1033 = vmatpush1.xpose.msra.mxu0 0.0
        %1034 = vmatprep.subr.mxu0 0.0
        %1035 = vmatpush1.xpose.msra.mxu0 0.0
        %1036 = vmatprep.subr.mxu0 0.0
        %1037 = vmatpush1.xpose.msra.mxu0 0.0
        %1038 = vmatprep.subr.mxu0 0.0
        %1039 = vmatpush1.xpose.msra.mxu0 0.0
        %1040 = vmatprep.subr.mxu0 0.0
        %1041 = vmatpush1.xpose.msra.mxu0 0.0
        %1042 = vmatprep.subr.mxu0 0.0
        %1043 = vmatpush1.xpose.msra.mxu0 0.0
        %1044 = vmatprep.subr.mxu0 0.0
        %1045 = vmatpush1.xpose.msra.mxu0 0.0
        %1046 = vmatprep.subr.mxu0 0.0
        %1047 = vmatpush1.xpose.msra.mxu0 0.0
        %1048 = vmatprep.subr.mxu0 0.0
        %1049 = vmatpush1.xpose.msra.mxu0 0.0
        %1050 = vmatprep.subr.mxu0 0.0
        %1051 = vmatpush1.xpose.msra.mxu0 0.0
        %1052 = vmatprep.subr.mxu0 0.0
        %1053 = vmatpush1.xpose.msra.mxu0 0.0
        %1054 = vmatprep.subr.mxu0 0.0
        %1055 = vmatpush1.xpose.msra.mxu0 0.0
        %1056 = vmatprep.subr.mxu0 0.0
        %1057 = vmatpush1.xpose.msra.mxu0 0.0
        %1058 = vmatprep.subr.mxu0 0.0
        %1059 = vmatpush1.xpose.msra.mxu0 0.0
        %1060 = vmatprep.subr.mxu0 0.0
        %1061 = vmatpush1.xpose.msra.mxu0 0.0
        %1062 = vmatprep.subr.mxu0 0.0
        %1063 = vmatpush1.xpose.msra.mxu0 0.0
        %1064 = vmatprep.subr.mxu0 0.0
        %1065 = vmatpush1.xpose.msra.mxu0 0.0
        %1066 = vmatprep.subr.mxu0 0.0
        %1067 = vmatpush1.xpose.msra.mxu0 0.0
        %1068 = vmatprep.subr.mxu0 0.0
        %1069 = vmatpush1.xpose.msra.mxu0 0.0
        %1070 = vmatprep.subr.mxu0 0.0
        %1071 = vmatpush1.xpose.msra.mxu0 0.0
        %1072 = vmatprep.subr.mxu0 0.0
        %1073 = vmatpush1.xpose.msra.mxu0 0.0
        %1074 = vmatprep.subr.mxu0 0.0
        %1075 = vmatpush1.xpose.msra.mxu0 0.0
        %1076 = vmatprep.subr.mxu0 0.0
        %1077 = vmatpush1.xpose.msra.mxu0 0.0
        %1078 = vmatprep.subr.mxu0 0.0
        %1079 = vmatpush1.xpose.msra.mxu0 0.0
        %1080 = vmatprep.subr.mxu0 0.0
        %1081 = vmatpush1.xpose.msra.mxu0 0.0
        %1082 = vmatprep.subr.mxu0 0.0
        %1083 = vmatpush1.xpose.msra.mxu0 0.0
        %1084 = vmatprep.subr.mxu0 0.0
        %1085 = vmatpush1.xpose.msra.mxu0 0.0
        %1086 = vmatprep.subr.mxu0 0.0
        %1087 = vmatpush1.xpose.msra.mxu0 0.0
        %1088 = vmatprep.mubr.f32.mxu0 0.0
        %1089 = vmatmul.mubr.f32.gmra.mrb[0].mxu0 %v1023
        %v1090 = vpop.f32.mrb[0].mxu0
        %v1091 = vadd.f32 0.0, %v1090
        %v1092 = vpop.f32.mrb[0].mxu0
        %1093 = vdwg.mxu0
        %vm1094 = vcmp.gt.f32.partialorder %v420, 0.0
        %v1095 = vsel %vm1094, %v1091, -1e+30
        %v1096 = vsel %vm903, %v1095, -inf
        %1097 = vmax.xlane.f32.xlu0 %v1096
        %v1098 = vpop.xlane.xlu0 %1097
        %v1099 = vsub.f32 %v1095, %v1098
        %v1100 = vmul.f32 %v1099, 1.442695
        %v1101 = vpow.pop %v1100
        %v1102 = vsel %vm903, %v1101, 0.0
        %1103 = vadd.xlane.f32.xlu0 %v1102
        %v1104 = vpop.xlane.xlu0 %1103
        %v1105 = vrcp.pop %v1104
        %v1106 = vmul.f32 %v1101, %v1105
        %v1108 = vsel %vm478, %v1106, 0
        %1110 = vmatprep.subr.mxu0 0.0
        %1111 = vmatpush1.msra.mxu0 %v789
        %1112 = vmatprep.subr.mxu0 0.0
        %1113 = vmatpush1.msra.mxu0 0.0
        %1114 = vmatprep.subr.mxu0 0.0
        %1115 = vmatpush1.msra.mxu0 0.0
        %1116 = vmatprep.subr.mxu0 0.0
        %1117 = vmatpush1.msra.mxu0 0.0
        %1118 = vmatprep.subr.mxu0 0.0
        %1119 = vmatpush1.msra.mxu0 0.0
        %1120 = vmatprep.subr.mxu0 0.0
        %1121 = vmatpush1.msra.mxu0 0.0
        %1122 = vmatprep.subr.mxu0 0.0
        %1123 = vmatpush1.msra.mxu0 0.0
        %1124 = vmatprep.subr.mxu0 0.0
        %1125 = vmatpush1.msra.mxu0 0.0
        %1126 = vmatprep.subr.mxu0 0.0
        %1127 = vmatpush1.msra.mxu0 0.0
        %1128 = vmatprep.subr.mxu0 0.0
        %1129 = vmatpush1.msra.mxu0 0.0
        %1130 = vmatprep.subr.mxu0 0.0
        %1131 = vmatpush1.msra.mxu0 0.0
        %1132 = vmatprep.subr.mxu0 0.0
        %1133 = vmatpush1.msra.mxu0 0.0
        %1134 = vmatprep.subr.mxu0 0.0
        %1135 = vmatpush1.msra.mxu0 0.0
        %1136 = vmatprep.subr.mxu0 0.0
        %1137 = vmatpush1.msra.mxu0 0.0
        %1138 = vmatprep.subr.mxu0 0.0
        %1139 = vmatpush1.msra.mxu0 0.0
        %1140 = vmatprep.subr.mxu0 0.0
        %1141 = vmatpush1.msra.mxu0 0.0
        %1142 = vmatprep.subr.mxu0 0.0
        %1143 = vmatpush1.msra.mxu0 0.0
        %1144 = vmatprep.subr.mxu0 0.0
        %1145 = vmatpush1.msra.mxu0 0.0
        %1146 = vmatprep.subr.mxu0 0.0
        %1147 = vmatpush1.msra.mxu0 0.0
        %1148 = vmatprep.subr.mxu0 0.0
        %1149 = vmatpush1.msra.mxu0 0.0
        %1150 = vmatprep.subr.mxu0 0.0
        %1151 = vmatpush1.msra.mxu0 0.0
        %1152 = vmatprep.subr.mxu0 0.0
        %1153 = vmatpush1.msra.mxu0 0.0
        %1154 = vmatprep.subr.mxu0 0.0
        %1155 = vmatpush1.msra.mxu0 0.0
        %1156 = vmatprep.subr.mxu0 0.0
        %1157 = vmatpush1.msra.mxu0 0.0
        %1158 = vmatprep.subr.mxu0 0.0
        %1159 = vmatpush1.msra.mxu0 0.0
        %1160 = vmatprep.subr.mxu0 0.0
        %1161 = vmatpush1.msra.mxu0 0.0
        %1162 = vmatprep.subr.mxu0 0.0
        %1163 = vmatpush1.msra.mxu0 0.0
        %1164 = vmatprep.subr.mxu0 0.0
        %1165 = vmatpush1.msra.mxu0 0.0
        %1166 = vmatprep.subr.mxu0 0.0
        %1167 = vmatpush1.msra.mxu0 0.0
        %1168 = vmatprep.subr.mxu0 0.0
        %1169 = vmatpush1.msra.mxu0 0.0
        %1170 = vmatprep.subr.mxu0 0.0
        %1171 = vmatpush1.msra.mxu0 0.0
        %1172 = vmatprep.subr.mxu0 0.0
        %1173 = vmatpush1.msra.mxu0 0.0
        %1174 = vmatprep.mubr.f32.mxu0 0.0
        %1175 = vmatmul.mubr.f32.gmra.mrb[0].mxu0 %v1108
        %v1176 = vpop.f32.mrb[0].mxu0
        %v1177 = vadd.f32 0.0, %v1176
        %v1178 = vpop.f32.mrb[0].mxu0
        %1179 = vdwg.mxu0
        %1180 = vst [vmem:[%s408] sm:$0x1] %v1177
        %s1181 = sand.u32 %s225, 1
        %s1182 = scalar_lea.sflag [#allocation4], %s1181
        %s1183 = sand.u32 %s225, 1
        %s1184 = scalar_lea.vmem [#allocation10], %s1183
        // Predicated region
        $region69: #{tpu_custom_call.1} parent=51 // pred_check
          %p1185 = pneg %p235
        $region70: #{tpu_custom_call.1} parent=51 // pred_check_branch
          %1187 = sbr.rel (%p1185) target = $region72
        $region71: #{tpu_custom_call.1} parent=51 // pred_region
          %s1189 = ssub.s32 16, 16
          %1190 = vsyncadd %s1182, %s1189
          %s1191 = smul.addr %s29, 16
          %s1192 = scalar_lea.hbm %s8, %s1191
          %s1194 = sshll.u32 %s1184, 4
          %s1195 = int_to_ptr.vmem [resolvable:$true] %s1194
          %1197 = dma.vmem_to_hbm [thread:$0]  %s1195, 16, %s1192, %s1182
        $region72: #{tpu_custom_call.1} parent=51 // pred_fallthru
          _
      $region52: #{tpu_custom_call.1} parent=5 // pred_fallthru
        _
      %p1198 = scmp.le.s32.totalorder 2, %s24
      // Predicated region
      $region73: #{tpu_custom_call.1} parent=5 // pred_check
        %p1199 = pneg %p1198
      $region74: #{tpu_custom_call.1} parent=5 // pred_check_branch
        %1201 = sbr.rel (%p1199) target = $region76
      $region75: #{tpu_custom_call.1} parent=5 // pred_region
        %s1202 = ssub.s32 %s24, 2
        // Predicated region
        $region77: #{tpu_custom_call.1} parent=75 // pred_check
          %p1203 = pneg %p241
        $region78: #{tpu_custom_call.1} parent=75 // pred_check_branch
          %1205 = sbr.rel (%p1203) target = $region80
        $region79: #{tpu_custom_call.1} parent=75 // pred_region
          %s1206 = sand.u32 %s226, 1
          %s1207 = scalar_lea.sflag [#allocation4], %s1206
          %s1208 = sand.u32 %s226, 1
          %s1209 = scalar_lea.vmem [#allocation10], %s1208
          %1210 = dma.done %s1207, 16
        $region80: #{tpu_custom_call.1} parent=75 // pred_fallthru
          _
      $region76: #{tpu_custom_call.1} parent=5 // pred_fallthru
        _
    $region6: #{tpu_custom_call.1} parent=1 // loop_footer
      %s28 = sadd.s32 1, %s24
    $region7: #{tpu_custom_call.1} parent=1 // loop_footer_branch
      %23 = sbr.rel target = $region3
    $region8: #{tpu_custom_call.1} parent=1 // loop_exit
      _
    %1211 = vsyncpa [#allocation3], 1
    %s1212 = scalar_lea.sflag [#allocation3], 1
    %1213 = vsyncpa %s1212, 1
    %1214 = vsyncpa [#allocation6], 1
    %s1215 = scalar_lea.sflag [#allocation6], 1
    %1216 = vsyncpa %s1215, 1
    %1217 = vsyncpa [#allocation9], 1
    %1218 = vsyncpa [#allocation4], 1
    %s1219 = scalar_lea.sflag [#allocation4], 1
    %1220 = vsyncpa %s1219, 1

</llo_original>
